<compile_context>
chip_gen: v7x
topology: tpu7x:2x2x1
jax: 0.10.0
libtpu: 0.0.40
codegen_flags: <defaults>
</compile_context>

<pallas_src>
import functools

import numpy as np
import jax
import jax.numpy as jnp
from jax import lax
from jax.experimental import pallas as pl
from jax.experimental.pallas import tpu as pltpu


# ----------------------------- host-side precompute -----------------------------

def _interp_matrix_np(out_size, in_size):
    """Row-interpolation matrix for bilinear resize with align_corners=True."""
    a = np.zeros((out_size, in_size), np.float32)
    if out_size == 1:
        src = np.zeros((1,), np.float64)
    else:
        src = np.arange(out_size, dtype=np.float64) * ((in_size - 1) / (out_size - 1))
    i0 = np.clip(np.floor(src).astype(np.int64), 0, in_size - 1)
    i1 = np.minimum(i0 + 1, in_size - 1)
    frac = (src - i0).astype(np.float32)
    rows = np.arange(out_size)
    np.add.at(a, (rows, i0), 1.0 - frac)
    np.add.at(a, (rows, i1), frac)
    return a


def _shift_rows_np(a, s):
    """out[p, :] = a[p + s, :], zero where p + s falls outside [0, rows)."""
    out = np.zeros_like(a)
    n = a.shape[0]
    if s == 0:
        out[...] = a
    elif s > 0:
        out[:n - s] = a[s:]
    else:
        out[-s:] = a[:n + s]
    return out


def _fold_conv_cols(w_kern, t_shift):
    """U[i] = sum_j w[i, j] * T_{dj=j-1}.  Elementwise (no matmul) => exact f32."""
    return jnp.sum(w_kern[:, :, None, None] * t_shift[None, :, :, :], axis=1)


# ----------------------------- Pallas kernel -----------------------------

def _bm_kernel(x_ref, sm_ref, u_ref, d_ref, et_ref, b_ref, o_ref):
    """One grid step: `nb` images, fully fused conv1+ReLU+conv2+residual+resize+conv3."""
    nb = x_ref.shape[0]
    dot = functools.partial(jnp.dot, preferred_element_type=jnp.float32)

    def conv3x3(img, k):
        # 3x3 'same' cross-correlation as MXU matmuls with precomputed shift/tap
        # matrices (S_0 == identity is skipped).  No halo buffer, no masked stores.
        r0 = dot(img, u_ref[3 * k + 0])
        r1 = dot(img, u_ref[3 * k + 1])
        r2 = dot(img, u_ref[3 * k + 2])
        return dot(sm_ref[0], r0) + r1 + dot(sm_ref[1], r2) + b_ref[k]

    for b in range(nb):                                   # nb is small & static -> unrolled
        x = x_ref[b]                                      # (h, w)
        y = jnp.maximum(conv3x3(x, 0), 0.0)               # conv1 + ReLU
        res = conv3x3(y, 1) + x                           # conv2 + residual
        # bilinear resize (align_corners=True) with conv_upsample folded in:
        #   out = sum_i D_i @ (res @ E_i^T) + b3     (E_i^T already lane-padded)
        acc = dot(d_ref[0], dot(res, et_ref[0]))
        acc = acc + dot(d_ref[1], dot(res, et_ref[1]))
        acc = acc + dot(d_ref[2], dot(res, et_ref[2]))
        o_ref[b] = acc + b_ref[2]                         # lane-dense (HO, WO_pad) store


# ----------------------------- wrapper -----------------------------

def _pick_images_per_step(n, cap=4):
    """Images per grid step: prefer an even number of steps (v7x has 2 TensorCores),
    then as many images per step as possible (amortize ~600-cycle step overhead)."""
    divs = [d for d in range(1, min(n, cap) + 1) if n % d == 0]
    even = [d for d in divs if (n // d) % 2 == 0]
    return max(even) if even else max(divs)


def bm_forward(params, x_nchw, upsample_size):
    n, c, h, w = x_nchw.shape
    assert c == 1, "BM is a single-channel module"
    ho, wo = int(upsample_size[0]), int(upsample_size[1])
    wo_pad = ((wo + 127) // 128) * 128          # lane-dense output block -> unmasked vst
    nb = _pick_images_per_step(n)

    x = x_nchw[:, 0, :, :].astype(jnp.float32)                                     # (n, h, w)

    # --- fold conv1/conv2 into shift/tap matrices (all-MXU conv, no halo buffers) ---
    s_shift = jnp.asarray(np.stack(
        [_shift_rows_np(np.eye(h, dtype=np.float32), d) for d in (-1, 1)]))        # (2, h, h)
    t_shift = jnp.asarray(np.stack(
        [_shift_rows_np(np.eye(w, dtype=np.float32), d).T for d in (-1, 0, 1)]))   # (3, w, w)
    u1 = _fold_conv_cols(params["w1"].reshape(3, 3).astype(jnp.float32), t_shift)
    u2 = _fold_conv_cols(params["w2"].reshape(3, 3).astype(jnp.float32), t_shift)
    u_all = jnp.concatenate([u1, u2], axis=0)                                      # (6, w, w)

    # --- fold conv_upsample into the bilinear-resize matrices ---
    a_h = _interp_matrix_np(ho, h)                                                 # (ho, h)
    a_w = _interp_matrix_np(wo, w)                                                 # (wo, w)
    d_mats = jnp.asarray(np.stack([_shift_rows_np(a_h, d) for d in (-1, 0, 1)]))   # (3, ho, h)
    c_mats = jnp.asarray(np.stack([_shift_rows_np(a_w, d) for d in (-1, 0, 1)]))   # (3, wo, w)
    w3 = params["w3"].reshape(3, 3).astype(jnp.float32)
    e_mats = jnp.sum(w3[:, :, None, None] * c_mats[None, :, :, :], axis=1)         # (3, wo, w)
    et = jnp.transpose(e_mats, (0, 2, 1))                                          # (3, w, wo)
    et = jnp.pad(et, ((0, 0), (0, 0), (0, wo_pad - wo)))                           # (3, w, wo_pad)

    bias = jnp.concatenate([params["b1"], params["b2"],
                            params["b3"]]).astype(jnp.float32)                     # (3,)

    out = pl.pallas_call(
        _bm_kernel,
        out_shape=jax.ShapeDtypeStruct((n, ho, wo_pad), jnp.float32),
        grid=(n // nb,),
        in_specs=[
            pl.BlockSpec((nb, h, w), lambda s: (s, 0, 0)),              # x batch block
            pl.BlockSpec((2, h, h), lambda s: (0, 0, 0)),               # row-shift matrices
            pl.BlockSpec((6, w, w), lambda s: (0, 0, 0)),               # conv1/conv2 taps
            pl.BlockSpec((3, ho, h), lambda s: (0, 0, 0)),              # D_i (resize+conv3)
            pl.BlockSpec((3, w, wo_pad), lambda s: (0, 0, 0)),          # E_i^T (lane-padded)
            pl.BlockSpec(memory_space=pltpu.MemorySpace.SMEM),          # biases (3,)
        ],
        out_specs=pl.BlockSpec((nb, ho, wo_pad), lambda s: (s, 0, 0)),
        compiler_params=pltpu.CompilerParams(dimension_semantics=("parallel",)),
    )(x, s_shift, u_all, d_mats, et, bias)

    return out[:, None, :, :wo]                                         # back to NCHW


# ----------------------------- deterministic params -----------------------------

def init_params(key):
    ks = jax.random.split(key, 6)

    def conv_p(kw, kb):
        wgt = jax.random.normal(kw, (1, 1, 3, 3), jnp.float32) / 3.0
        b = 0.1 * jax.random.normal(kb, (1,), jnp.float32)
        return wgt, b

    w1, b1 = conv_p(ks[0], ks[1])
    w2, b2 = conv_p(ks[2], ks[3])
    w3, b3 = conv_p(ks[4], ks[5])
    return dict(w1=w1, b1=b1, w2=w2, b2=b2, w3=w3, b3=b3)


# ----------------------------- pure-JAX reference -----------------------------

def ref_forward(params, x, upsample_size):
    hp = jax.lax.Precision.HIGHEST    # keep the HLO path in full f32 for a tight check

    def conv3x3(img, wgt, b):
        y = lax.conv_general_dilated(img, wgt, (1, 1), [(1, 1), (1, 1)],
                                     dimension_numbers=("NCHW", "OIHW", "NCHW"),
                                     precision=hp)
        return y + b.reshape(1, -1, 1, 1)

    out = jnp.maximum(conv3x3(x, params["w1"], params["b1"]), 0.0)
    out = conv3x3(out, params["w2"], params["b2"]) + x
    ho, wo = int(upsample_size[0]), int(upsample_size[1])
    ah = jnp.asarray(_interp_matrix_np(ho, x.shape[2]))
    aw = jnp.asarray(_interp_matrix_np(wo, x.shape[3]))
    out = jnp.einsum("oh,nchw,pw->ncop", ah, out, aw, precision=hp)
    return conv3x3(out, params["w3"], params["b3"])


# ----------------------------- main -----------------------------

if __name__ == "__main__":
    key = jax.random.PRNGKey(0)
    pkey, xkey = jax.random.split(key)
    params = init_params(pkey)

    # Small shapes consistent with the module: N=2, C=1, H=24, W=32; upsample to (40, 56).
    x = jax.random.normal(xkey, (2, 1, 24, 32), jnp.float32)
    upsample_size = (40, 56)

    fwd = jax.jit(functools.partial(bm_forward, upsample_size=upsample_size))
    out = jax.block_until_ready(fwd(params, x))
    assert out.shape == (2, 1, 40, 56), out.shape
    assert bool(jnp.all(jnp.isfinite(out)))

    ref_fn = jax.jit(functools.partial(ref_forward, upsample_size=upsample_size))
    ref = jax.block_until_ready(ref_fn(params, x))
    err = float(jnp.max(jnp.abs(out - ref)))
    # Tightened from 2e-2: both paths are (near-)exact f32, so 1e-4 catches any
    # wrong shift / fold / padding bug while leaving margin for fp-assoc noise.
    assert jnp.allclose(out, ref, rtol=1e-4, atol=1e-4), f"max abs err={err}"

    print("KERNEL_OK")
</pallas_src>

<mosaic_0001>
module attributes {stable_mosaic.version = 11 : i64} {
  func.func @_bm_kernel(%arg0: i32, %arg1: memref<1x24x32xf32, #tpu.memory_space<vmem>>, %arg2: memref<2x24x24xf32, #tpu.memory_space<vmem>>, %arg3: memref<6x32x32xf32, #tpu.memory_space<vmem>>, %arg4: memref<3x40x24xf32, #tpu.memory_space<vmem>>, %arg5: memref<3x32x128xf32, #tpu.memory_space<vmem>>, %arg6: memref<3xf32, #tpu.memory_space<smem>>, %arg7: memref<1x40x128xf32, #tpu.memory_space<vmem>>) attributes {dimension_semantics = [#tpu.dimension_semantics<parallel>], iteration_bounds = array<i64: 2>, scalar_prefetch = 0 : i64, scratch_operands = 0 : i64, tpu.core_type = #tpu.core_type<tc>, window_params = [{transform_indices = @transform_0, window_bounds = array<i64: 1, 24, 32>}, {pipeline_mode = #tpu.pipeline_mode<synchronous>, transform_indices = @transform_1, window_bounds = array<i64: 2, 24, 24>}, {pipeline_mode = #tpu.pipeline_mode<synchronous>, transform_indices = @transform_2, window_bounds = array<i64: 6, 32, 32>}, {pipeline_mode = #tpu.pipeline_mode<synchronous>, transform_indices = @transform_3, window_bounds = array<i64: 3, 40, 24>}, {pipeline_mode = #tpu.pipeline_mode<synchronous>, transform_indices = @transform_4, window_bounds = array<i64: 3, 32, 128>}, {transform_indices = @transform_5, window_bounds = array<i64: 3>}, {transform_indices = @transform_6, window_bounds = array<i64: 1, 40, 128>}]} {
    %c0 = arith.constant 0 : index
    %c0_0 = arith.constant 0 : index
    %c0_1 = arith.constant 0 : index
    %0 = vector.load %arg1[%c0, %c0_0, %c0_1] : memref<1x24x32xf32, #tpu.memory_space<vmem>>, vector<1x24x32xf32>
    %1 = vector.shape_cast %0 : vector<1x24x32xf32> to vector<24x32xf32>
    %c0_2 = arith.constant 0 : index
    %c0_3 = arith.constant 0 : index
    %c0_4 = arith.constant 0 : index
    %2 = vector.load %arg3[%c0_2, %c0_3, %c0_4] : memref<6x32x32xf32, #tpu.memory_space<vmem>>, vector<1x32x32xf32>
    %3 = vector.shape_cast %2 : vector<1x32x32xf32> to vector<32x32xf32>
    %cst = arith.constant dense<0.000000e+00> : vector<24x32xf32>
    %4 = tpu.matmul %1, %3, %cst {dimension_numbers = #tpu.dot_dimension_numbers<[1], [0], [0], [1], [0, 0, 1, 1], [], []>} : vector<24x32xf32>, vector<32x32xf32>, vector<24x32xf32> -> vector<24x32xf32>
    %c1 = arith.constant 1 : index
    %c0_5 = arith.constant 0 : index
    %c0_6 = arith.constant 0 : index
    %5 = vector.load %arg3[%c1, %c0_5, %c0_6] : memref<6x32x32xf32, #tpu.memory_space<vmem>>, vector<1x32x32xf32>
    %6 = vector.shape_cast %5 : vector<1x32x32xf32> to vector<32x32xf32>
    %cst_7 = arith.constant dense<0.000000e+00> : vector<24x32xf32>
    %7 = tpu.matmul %1, %6, %cst_7 {dimension_numbers = #tpu.dot_dimension_numbers<[1], [0], [0], [1], [0, 0, 1, 1], [], []>} : vector<24x32xf32>, vector<32x32xf32>, vector<24x32xf32> -> vector<24x32xf32>
    %c2 = arith.constant 2 : index
    %c0_8 = arith.constant 0 : index
    %c0_9 = arith.constant 0 : index
    %8 = vector.load %arg3[%c2, %c0_8, %c0_9] : memref<6x32x32xf32, #tpu.memory_space<vmem>>, vector<1x32x32xf32>
    %9 = vector.shape_cast %8 : vector<1x32x32xf32> to vector<32x32xf32>
    %cst_10 = arith.constant dense<0.000000e+00> : vector<24x32xf32>
    %10 = tpu.matmul %1, %9, %cst_10 {dimension_numbers = #tpu.dot_dimension_numbers<[1], [0], [0], [1], [0, 0, 1, 1], [], []>} : vector<24x32xf32>, vector<32x32xf32>, vector<24x32xf32> -> vector<24x32xf32>
    %c0_11 = arith.constant 0 : index
    %c0_12 = arith.constant 0 : index
    %c0_13 = arith.constant 0 : index
    %11 = vector.load %arg2[%c0_11, %c0_12, %c0_13] : memref<2x24x24xf32, #tpu.memory_space<vmem>>, vector<1x24x24xf32>
    %12 = vector.shape_cast %11 : vector<1x24x24xf32> to vector<24x24xf32>
    %cst_14 = arith.constant dense<0.000000e+00> : vector<24x32xf32>
    %13 = tpu.matmul %12, %4, %cst_14 {dimension_numbers = #tpu.dot_dimension_numbers<[1], [0], [0], [1], [0, 0, 1, 1], [], []>} : vector<24x24xf32>, vector<24x32xf32>, vector<24x32xf32> -> vector<24x32xf32>
    %14 = arith.addf %13, %7 : vector<24x32xf32>
    %c1_15 = arith.constant 1 : index
    %c0_16 = arith.constant 0 : index
    %c0_17 = arith.constant 0 : index
    %15 = vector.load %arg2[%c1_15, %c0_16, %c0_17] : memref<2x24x24xf32, #tpu.memory_space<vmem>>, vector<1x24x24xf32>
    %16 = vector.shape_cast %15 : vector<1x24x24xf32> to vector<24x24xf32>
    %cst_18 = arith.constant dense<0.000000e+00> : vector<24x32xf32>
    %17 = tpu.matmul %16, %10, %cst_18 {dimension_numbers = #tpu.dot_dimension_numbers<[1], [0], [0], [1], [0, 0, 1, 1], [], []>} : vector<24x24xf32>, vector<24x32xf32>, vector<24x32xf32> -> vector<24x32xf32>
    %18 = arith.addf %14, %17 : vector<24x32xf32>
    %c0_19 = arith.constant 0 : index
    %19 = memref.load %arg6[%c0_19] : memref<3xf32, #tpu.memory_space<smem>>
    %20 = vector.broadcast %19 : f32 to vector<24x32xf32>
    %21 = arith.addf %18, %20 : vector<24x32xf32>
    %cst_20 = arith.constant 0.000000e+00 : f32
    %22 = vector.broadcast %cst_20 : f32 to vector<24x32xf32>
    %23 = arith.maximumf %21, %22 : vector<24x32xf32>
    %c3 = arith.constant 3 : index
    %c0_21 = arith.constant 0 : index
    %c0_22 = arith.constant 0 : index
    %24 = vector.load %arg3[%c3, %c0_21, %c0_22] : memref<6x32x32xf32, #tpu.memory_space<vmem>>, vector<1x32x32xf32>
    %25 = vector.shape_cast %24 : vector<1x32x32xf32> to vector<32x32xf32>
    %cst_23 = arith.constant dense<0.000000e+00> : vector<24x32xf32>
    %26 = tpu.matmul %23, %25, %cst_23 {dimension_numbers = #tpu.dot_dimension_numbers<[1], [0], [0], [1], [0, 0, 1, 1], [], []>} : vector<24x32xf32>, vector<32x32xf32>, vector<24x32xf32> -> vector<24x32xf32>
    %c4 = arith.constant 4 : index
    %c0_24 = arith.constant 0 : index
    %c0_25 = arith.constant 0 : index
    %27 = vector.load %arg3[%c4, %c0_24, %c0_25] : memref<6x32x32xf32, #tpu.memory_space<vmem>>, vector<1x32x32xf32>
    %28 = vector.shape_cast %27 : vector<1x32x32xf32> to vector<32x32xf32>
    %cst_26 = arith.constant dense<0.000000e+00> : vector<24x32xf32>
    %29 = tpu.matmul %23, %28, %cst_26 {dimension_numbers = #tpu.dot_dimension_numbers<[1], [0], [0], [1], [0, 0, 1, 1], [], []>} : vector<24x32xf32>, vector<32x32xf32>, vector<24x32xf32> -> vector<24x32xf32>
    %c5 = arith.constant 5 : index
    %c0_27 = arith.constant 0 : index
    %c0_28 = arith.constant 0 : index
    %30 = vector.load %arg3[%c5, %c0_27, %c0_28] : memref<6x32x32xf32, #tpu.memory_space<vmem>>, vector<1x32x32xf32>
    %31 = vector.shape_cast %30 : vector<1x32x32xf32> to vector<32x32xf32>
    %cst_29 = arith.constant dense<0.000000e+00> : vector<24x32xf32>
    %32 = tpu.matmul %23, %31, %cst_29 {dimension_numbers = #tpu.dot_dimension_numbers<[1], [0], [0], [1], [0, 0, 1, 1], [], []>} : vector<24x32xf32>, vector<32x32xf32>, vector<24x32xf32> -> vector<24x32xf32>
    %c0_30 = arith.constant 0 : index
    %c0_31 = arith.constant 0 : index
    %c0_32 = arith.constant 0 : index
    %33 = vector.load %arg2[%c0_30, %c0_31, %c0_32] : memref<2x24x24xf32, #tpu.memory_space<vmem>>, vector<1x24x24xf32>
    %34 = vector.shape_cast %33 : vector<1x24x24xf32> to vector<24x24xf32>
    %cst_33 = arith.constant dense<0.000000e+00> : vector<24x32xf32>
    %35 = tpu.matmul %34, %26, %cst_33 {dimension_numbers = #tpu.dot_dimension_numbers<[1], [0], [0], [1], [0, 0, 1, 1], [], []>} : vector<24x24xf32>, vector<24x32xf32>, vector<24x32xf32> -> vector<24x32xf32>
    %36 = arith.addf %35, %29 : vector<24x32xf32>
    %c1_34 = arith.constant 1 : index
    %c0_35 = arith.constant 0 : index
    %c0_36 = arith.constant 0 : index
    %37 = vector.load %arg2[%c1_34, %c0_35, %c0_36] : memref<2x24x24xf32, #tpu.memory_space<vmem>>, vector<1x24x24xf32>
    %38 = vector.shape_cast %37 : vector<1x24x24xf32> to vector<24x24xf32>
    %cst_37 = arith.constant dense<0.000000e+00> : vector<24x32xf32>
    %39 = tpu.matmul %38, %32, %cst_37 {dimension_numbers = #tpu.dot_dimension_numbers<[1], [0], [0], [1], [0, 0, 1, 1], [], []>} : vector<24x24xf32>, vector<24x32xf32>, vector<24x32xf32> -> vector<24x32xf32>
    %40 = arith.addf %36, %39 : vector<24x32xf32>
    %c1_38 = arith.constant 1 : index
    %41 = memref.load %arg6[%c1_38] : memref<3xf32, #tpu.memory_space<smem>>
    %42 = vector.broadcast %41 : f32 to vector<24x32xf32>
    %43 = arith.addf %40, %42 : vector<24x32xf32>
    %44 = arith.addf %43, %1 : vector<24x32xf32>
    %c0_39 = arith.constant 0 : index
    %c0_40 = arith.constant 0 : index
    %c0_41 = arith.constant 0 : index
    %45 = vector.load %arg4[%c0_39, %c0_40, %c0_41] : memref<3x40x24xf32, #tpu.memory_space<vmem>>, vector<1x40x24xf32>
    %46 = vector.shape_cast %45 : vector<1x40x24xf32> to vector<40x24xf32>
    %c0_42 = arith.constant 0 : index
    %c0_43 = arith.constant 0 : index
    %c0_44 = arith.constant 0 : index
    %47 = vector.load %arg5[%c0_42, %c0_43, %c0_44] : memref<3x32x128xf32, #tpu.memory_space<vmem>>, vector<1x32x128xf32>
    %48 = vector.shape_cast %47 : vector<1x32x128xf32> to vector<32x128xf32>
    %cst_45 = arith.constant dense<0.000000e+00> : vector<24x128xf32>
    %49 = tpu.matmul %44, %48, %cst_45 {dimension_numbers = #tpu.dot_dimension_numbers<[1], [0], [0], [1], [0, 0, 1, 1], [], []>} : vector<24x32xf32>, vector<32x128xf32>, vector<24x128xf32> -> vector<24x128xf32>
    %cst_46 = arith.constant dense<0.000000e+00> : vector<40x128xf32>
    %50 = tpu.matmul %46, %49, %cst_46 {dimension_numbers = #tpu.dot_dimension_numbers<[1], [0], [0], [1], [0, 0, 1, 1], [], []>} : vector<40x24xf32>, vector<24x128xf32>, vector<40x128xf32> -> vector<40x128xf32>
    %c1_47 = arith.constant 1 : index
    %c0_48 = arith.constant 0 : index
    %c0_49 = arith.constant 0 : index
    %51 = vector.load %arg4[%c1_47, %c0_48, %c0_49] : memref<3x40x24xf32, #tpu.memory_space<vmem>>, vector<1x40x24xf32>
    %52 = vector.shape_cast %51 : vector<1x40x24xf32> to vector<40x24xf32>
    %c1_50 = arith.constant 1 : index
    %c0_51 = arith.constant 0 : index
    %c0_52 = arith.constant 0 : index
    %53 = vector.load %arg5[%c1_50, %c0_51, %c0_52] : memref<3x32x128xf32, #tpu.memory_space<vmem>>, vector<1x32x128xf32>
    %54 = vector.shape_cast %53 : vector<1x32x128xf32> to vector<32x128xf32>
    %cst_53 = arith.constant dense<0.000000e+00> : vector<24x128xf32>
    %55 = tpu.matmul %44, %54, %cst_53 {dimension_numbers = #tpu.dot_dimension_numbers<[1], [0], [0], [1], [0, 0, 1, 1], [], []>} : vector<24x32xf32>, vector<32x128xf32>, vector<24x128xf32> -> vector<24x128xf32>
    %cst_54 = arith.constant dense<0.000000e+00> : vector<40x128xf32>
    %56 = tpu.matmul %52, %55, %cst_54 {dimension_numbers = #tpu.dot_dimension_numbers<[1], [0], [0], [1], [0, 0, 1, 1], [], []>} : vector<40x24xf32>, vector<24x128xf32>, vector<40x128xf32> -> vector<40x128xf32>
    %57 = arith.addf %50, %56 : vector<40x128xf32>
    %c2_55 = arith.constant 2 : index
    %c0_56 = arith.constant 0 : index
    %c0_57 = arith.constant 0 : index
    %58 = vector.load %arg4[%c2_55, %c0_56, %c0_57] : memref<3x40x24xf32, #tpu.memory_space<vmem>>, vector<1x40x24xf32>
    %59 = vector.shape_cast %58 : vector<1x40x24xf32> to vector<40x24xf32>
    %c2_58 = arith.constant 2 : index
    %c0_59 = arith.constant 0 : index
    %c0_60 = arith.constant 0 : index
    %60 = vector.load %arg5[%c2_58, %c0_59, %c0_60] : memref<3x32x128xf32, #tpu.memory_space<vmem>>, vector<1x32x128xf32>
    %61 = vector.shape_cast %60 : vector<1x32x128xf32> to vector<32x128xf32>
    %cst_61 = arith.constant dense<0.000000e+00> : vector<24x128xf32>
    %62 = tpu.matmul %44, %61, %cst_61 {dimension_numbers = #tpu.dot_dimension_numbers<[1], [0], [0], [1], [0, 0, 1, 1], [], []>} : vector<24x32xf32>, vector<32x128xf32>, vector<24x128xf32> -> vector<24x128xf32>
    %cst_62 = arith.constant dense<0.000000e+00> : vector<40x128xf32>
    %63 = tpu.matmul %59, %62, %cst_62 {dimension_numbers = #tpu.dot_dimension_numbers<[1], [0], [0], [1], [0, 0, 1, 1], [], []>} : vector<40x24xf32>, vector<24x128xf32>, vector<40x128xf32> -> vector<40x128xf32>
    %64 = arith.addf %57, %63 : vector<40x128xf32>
    %c2_63 = arith.constant 2 : index
    %65 = memref.load %arg6[%c2_63] : memref<3xf32, #tpu.memory_space<smem>>
    %66 = vector.broadcast %65 : f32 to vector<40x128xf32>
    %67 = arith.addf %64, %66 : vector<40x128xf32>
    %c0_64 = arith.constant 0 : index
    %c0_65 = arith.constant 0 : index
    %c0_66 = arith.constant 0 : index
    %68 = vector.load %arg7[%c0_64, %c0_65, %c0_66] : memref<1x40x128xf32, #tpu.memory_space<vmem>>, vector<1x40x128xf32>
    %69 = vector.shape_cast %68 : vector<1x40x128xf32> to vector<40x128xf32>
    %70 = vector.shape_cast %67 : vector<40x128xf32> to vector<1x40x128xf32>
    tpu.vector_store %arg7[%c0_64, %c0_65, %c0_66], %70 {strides = array<i32>} : memref<1x40x128xf32, #tpu.memory_space<vmem>>, vector<1x40x128xf32>,
    return
  }
  func.func @transform_0(%arg0: i32) -> (i32, i32, i32) {
    %c0_i32 = arith.constant 0 : i32
    %c0_i32_0 = arith.constant 0 : i32
    %c0_i32_1 = arith.constant 0 : i32
    return %arg0, %c0_i32, %c0_i32_0 : i32, i32, i32
  }
  func.func @transform_1(%arg0: i32) -> (i32, i32, i32) {
    %c0_i32 = arith.constant 0 : i32
    %c0_i32_0 = arith.constant 0 : i32
    %c0_i32_1 = arith.constant 0 : i32
    %c0_i32_2 = arith.constant 0 : i32
    return %c0_i32, %c0_i32_0, %c0_i32_1 : i32, i32, i32
  }
  func.func @transform_2(%arg0: i32) -> (i32, i32, i32) {
    %c0_i32 = arith.constant 0 : i32
    %c0_i32_0 = arith.constant 0 : i32
    %c0_i32_1 = arith.constant 0 : i32
    %c0_i32_2 = arith.constant 0 : i32
    return %c0_i32, %c0_i32_0, %c0_i32_1 : i32, i32, i32
  }
  func.func @transform_3(%arg0: i32) -> (i32, i32, i32) {
    %c0_i32 = arith.constant 0 : i32
    %c0_i32_0 = arith.constant 0 : i32
    %c0_i32_1 = arith.constant 0 : i32
    %c0_i32_2 = arith.constant 0 : i32
    return %c0_i32, %c0_i32_0, %c0_i32_1 : i32, i32, i32
  }
  func.func @transform_4(%arg0: i32) -> (i32, i32, i32) {
    %c0_i32 = arith.constant 0 : i32
    %c0_i32_0 = arith.constant 0 : i32
    %c0_i32_1 = arith.constant 0 : i32
    %c0_i32_2 = arith.constant 0 : i32
    return %c0_i32, %c0_i32_0, %c0_i32_1 : i32, i32, i32
  }
  func.func @transform_5(%arg0: i32) -> i32 {
    %c0_i32 = arith.constant 0 : i32
    %c0_i32_0 = arith.constant 0 : i32
    return %c0_i32 : i32
  }
  func.func @transform_6(%arg0: i32) -> (i32, i32, i32) {
    %c0_i32 = arith.constant 0 : i32
    %c0_i32_0 = arith.constant 0 : i32
    %c0_i32_1 = arith.constant 0 : i32
    return %arg0, %c0_i32, %c0_i32_0 : i32, i32, i32
  }
}

</mosaic_0001>

<llo_original>
// kernel: bm_forward.1
$region0: #{bm_forward.1}
  #allocation0 [shape = 'u32[]', space=smem, size = 0x4, offset = 0x4, fixed_abs, tag = 'smem constant byte address 0x4 - core index']
  #allocation1 [shape = 'u32[144,128]{1,0:T(1,128)}', space=vmem, size = 0x12000, scoped, tag = 'internal scratch']
  %s0 = inlined_call_operand.vmem [shape: f32[2,24,32], index: 0, kind: input, shape index: {}]
  %s1 = inlined_call_operand.vmem [shape: f32[2,24,24], index: 1, kind: input, shape index: {}]
  %s2 = inlined_call_operand.vmem [shape: f32[6,32,32], index: 2, kind: input, shape index: {}]
  %s3 = inlined_call_operand.vmem [shape: f32[3,40,24], index: 3, kind: input, shape index: {}]
  %s4 = inlined_call_operand.vmem [shape: f32[3,32,128], index: 4, kind: input, shape index: {}]
  %s5 = inlined_call_operand.vmem [shape: f32[3], index: 5, kind: input, shape index: {}]
  %s6 = inlined_call_operand.vmem [shape: f32[2,40,128], index: 6, kind: output, shape index: {}]
  %s7 = sld [smem:[#allocation0]]
  $region61: #{bm_forward.1} parent=0
    _
  %s9 = ssub.s32 1, %s7
  %s10 = scalar_select 0, %s9, %s7
  $region1: #{bm_forward.1} parent=0
    #allocation2 [shape = 'u8[512]{0}', space=smem, size = 0x200, scoped, tag = 'input window, operand 5, single buffered']
    #allocation3 [shape = 's32[2]{0}', space=sflag, size = 0x8, scoped, tag = 'scoped memory for bm_forward.1']
    %11 = vsyncpa [#allocation3], 0
    loop: start=0, step=1, limit=4
    $region2: #{bm_forward.1} parent=1 // loop_pre_header
      _
    $region3: #{bm_forward.1} parent=1 // loop_header
      %s13 = sphi 0, %s17
      %p14 = scmp.ge.s32.totalorder %s13, 4
      %s23 = sphi 0, %s25
      %s26 = sphi 0, %s23
      %s27 = sphi 0, %s26
      %s43 = sphi 0, %s27
      %s47 = sphi 0, %s47
      %s49 = sphi 0, %s47
      %s50 = sphi 0, %s49
      %s64 = sphi 0, %s50
      %s68 = sphi 0, %s68
      %s70 = sphi 0, %s68
      %s71 = sphi 0, %s70
      %s85 = sphi 0, %s71
      %s89 = sphi 0, %s89
      %s91 = sphi 0, %s89
      %s92 = sphi 0, %s91
      %s106 = sphi 0, %s92
      %s110 = sphi 0, %s110
      %s112 = sphi 0, %s110
      %s113 = sphi 0, %s112
      %s127 = sphi 0, %s113
      %s131 = sphi 0, %s131
      %s133 = sphi 0, %s131
      %s134 = sphi 0, %s133
      %s148 = sphi 0, %s134
      %s154 = sphi 0, %s156
      %s157 = sphi 0, %s154
      %s158 = sphi 0, %s157
      %s174 = sphi 0, %s158
    $region4: #{bm_forward.1} parent=1 // loop_header_branch
      %16 = sbr.rel (%p14) target = $region8
    $region5: #{bm_forward.1} parent=1 // loop_body
      %s18 = ssub.s32 %s13, 1
      %s19 = ssub.s32 %s13, 2
      %s20 = sadd.s32 %s13, 1
      %s21 = ssub.s32 %s13, %s20
      %p22 = scmp.eq.s32.totalorder %s21, 0
      %s24 = sadd.s32 %s23, 1
      %s25 = scalar_select %p22, %s23, %s24
      %p28 = pneg %p22
      %p29 = scmp.eq.s32.totalorder %s13, 1
      %p30 = por %p28, %p29
      %p31 = scmp.ne.s32.totalorder %s23, %s26
      %p32 = scmp.eq.s32.totalorder %s13, 0
      %p33 = por %p31, %p32
      %p34 = scmp.ne.s32.totalorder %s23, %s26
      %p35 = scmp.eq.s32.totalorder %s18, 1
      %p36 = por %p34, %p35
      %p37 = scmp.ne.s32.totalorder %s26, %s27
      %p38 = scmp.eq.s32.totalorder %s18, 0
      %p39 = por %p37, %p38
      %p40 = scmp.ne.s32.totalorder %s26, %s27
      %p41 = scmp.eq.s32.totalorder %s19, 1
      %p42 = por %p40, %p41
      %p44 = scmp.ne.s32.totalorder %s27, %s43
      %p45 = scmp.eq.s32.totalorder %s19, 0
      %p46 = por %p44, %p45
      %s48 = sadd.s32 %s47, 1
      %p51 = scmp.eq.s32.totalorder %s13, 1
      %p52 = scmp.ne.s32.totalorder %s47, %s49
      %p53 = scmp.eq.s32.totalorder %s13, 0
      %p54 = por %p52, %p53
      %p55 = scmp.ne.s32.totalorder %s47, %s49
      %p56 = scmp.eq.s32.totalorder %s18, 1
      %p57 = por %p55, %p56
      %p58 = scmp.ne.s32.totalorder %s49, %s50
      %p59 = scmp.eq.s32.totalorder %s18, 0
      %p60 = por %p58, %p59
      %p61 = scmp.ne.s32.totalorder %s49, %s50
      %p62 = scmp.eq.s32.totalorder %s19, 1
      %p63 = por %p61, %p62
      %p65 = scmp.ne.s32.totalorder %s50, %s64
      %p66 = scmp.eq.s32.totalorder %s19, 0
      %p67 = por %p65, %p66
      %s69 = sadd.s32 %s68, 1
      %p72 = scmp.eq.s32.totalorder %s13, 1
      %p73 = scmp.ne.s32.totalorder %s68, %s70
      %p74 = scmp.eq.s32.totalorder %s13, 0
      %p75 = por %p73, %p74
      %p76 = scmp.ne.s32.totalorder %s68, %s70
      %p77 = scmp.eq.s32.totalorder %s18, 1
      %p78 = por %p76, %p77
      %p79 = scmp.ne.s32.totalorder %s70, %s71
      %p80 = scmp.eq.s32.totalorder %s18, 0
      %p81 = por %p79, %p80
      %p82 = scmp.ne.s32.totalorder %s70, %s71
      %p83 = scmp.eq.s32.totalorder %s19, 1
      %p84 = por %p82, %p83
      %p86 = scmp.ne.s32.totalorder %s71, %s85
      %p87 = scmp.eq.s32.totalorder %s19, 0
      %p88 = por %p86, %p87
      %s90 = sadd.s32 %s89, 1
      %p93 = scmp.eq.s32.totalorder %s13, 1
      %p94 = scmp.ne.s32.totalorder %s89, %s91
      %p95 = scmp.eq.s32.totalorder %s13, 0
      %p96 = por %p94, %p95
      %p97 = scmp.ne.s32.totalorder %s89, %s91
      %p98 = scmp.eq.s32.totalorder %s18, 1
      %p99 = por %p97, %p98
      %p100 = scmp.ne.s32.totalorder %s91, %s92
      %p101 = scmp.eq.s32.totalorder %s18, 0
      %p102 = por %p100, %p101
      %p103 = scmp.ne.s32.totalorder %s91, %s92
      %p104 = scmp.eq.s32.totalorder %s19, 1
      %p105 = por %p103, %p104
      %p107 = scmp.ne.s32.totalorder %s92, %s106
      %p108 = scmp.eq.s32.totalorder %s19, 0
      %p109 = por %p107, %p108
      %s111 = sadd.s32 %s110, 1
      %p114 = scmp.eq.s32.totalorder %s13, 1
      %p115 = scmp.ne.s32.totalorder %s110, %s112
      %p116 = scmp.eq.s32.totalorder %s13, 0
      %p117 = por %p115, %p116
      %p118 = scmp.ne.s32.totalorder %s110, %s112
      %p119 = scmp.eq.s32.totalorder %s18, 1
      %p120 = por %p118, %p119
      %p121 = scmp.ne.s32.totalorder %s112, %s113
      %p122 = scmp.eq.s32.totalorder %s18, 0
      %p123 = por %p121, %p122
      %p124 = scmp.ne.s32.totalorder %s112, %s113
      %p125 = scmp.eq.s32.totalorder %s19, 1
      %p126 = por %p124, %p125
      %p128 = scmp.ne.s32.totalorder %s113, %s127
      %p129 = scmp.eq.s32.totalorder %s19, 0
      %p130 = por %p128, %p129
      %s132 = sadd.s32 %s131, 1
      %p135 = scmp.eq.s32.totalorder %s13, 1
      %p136 = scmp.ne.s32.totalorder %s131, %s133
      %p137 = scmp.eq.s32.totalorder %s13, 0
      %p138 = por %p136, %p137
      %p139 = scmp.ne.s32.totalorder %s131, %s133
      %p140 = scmp.eq.s32.totalorder %s18, 1
      %p141 = por %p139, %p140
      %p142 = scmp.ne.s32.totalorder %s133, %s134
      %p143 = scmp.eq.s32.totalorder %s18, 0
      %p144 = por %p142, %p143
      %p145 = scmp.ne.s32.totalorder %s133, %s134
      %p146 = scmp.eq.s32.totalorder %s19, 1
      %p147 = por %p145, %p146
      %p149 = scmp.ne.s32.totalorder %s134, %s148
      %p150 = scmp.eq.s32.totalorder %s19, 0
      %p151 = por %p149, %p150
      %s152 = ssub.s32 %s13, %s20
      %p153 = scmp.eq.s32.totalorder %s152, 0
      %s155 = sadd.s32 %s154, 1
      %s156 = scalar_select %p153, %s154, %s155
      %p159 = pneg %p153
      %p160 = scmp.eq.s32.totalorder %s13, 1
      %p161 = por %p159, %p160
      %p162 = scmp.ne.s32.totalorder %s154, %s157
      %p163 = scmp.eq.s32.totalorder %s13, 0
      %p164 = por %p162, %p163
      %p165 = scmp.ne.s32.totalorder %s154, %s157
      %p166 = scmp.eq.s32.totalorder %s18, 1
      %p167 = por %p165, %p166
      %p168 = scmp.ne.s32.totalorder %s157, %s158
      %p169 = scmp.eq.s32.totalorder %s18, 0
      %p170 = por %p168, %p169
      %p171 = scmp.ne.s32.totalorder %s157, %s158
      %p172 = scmp.eq.s32.totalorder %s19, 1
      %p173 = por %p171, %p172
      %p175 = scmp.ne.s32.totalorder %s158, %s174
      %p176 = scmp.eq.s32.totalorder %s19, 0
      %p177 = por %p175, %p176
      %p178 = scmp.le.s32.totalorder 1, %s13
      %p179 = scmp.lt.s32.totalorder %s13, 3
      %p180 = pnand %p178, %p179
      %p181 = pneg %p180
      // Predicated region
      $region9: #{bm_forward.1} parent=5 // pred_check
        _
      $region10: #{bm_forward.1} parent=5 // pred_check_branch
        %183 = sbr.rel (%p180) target = $region12
      $region11: #{bm_forward.1} parent=5 // pred_region
        %s184 = ssub.s32 %s13, 1
        // Predicated region
        $region13: #{bm_forward.1} parent=11 // pred_check
          %p185 = pneg %p60
        $region14: #{bm_forward.1} parent=11 // pred_check_branch
          %187 = sbr.rel (%p185) target = $region16
        $region15: #{bm_forward.1} parent=11 // pred_region
          _
        $region16: #{bm_forward.1} parent=11 // pred_fallthru
          _
        // Predicated region
        $region17: #{bm_forward.1} parent=11 // pred_check
          %p188 = pneg %p81
        $region18: #{bm_forward.1} parent=11 // pred_check_branch
          %190 = sbr.rel (%p188) target = $region20
        $region19: #{bm_forward.1} parent=11 // pred_region
          _
        $region20: #{bm_forward.1} parent=11 // pred_fallthru
          _
        // Predicated region
        $region21: #{bm_forward.1} parent=11 // pred_check
          %p191 = pneg %p102
        $region22: #{bm_forward.1} parent=11 // pred_check_branch
          %193 = sbr.rel (%p191) target = $region24
        $region23: #{bm_forward.1} parent=11 // pred_region
          _
        $region24: #{bm_forward.1} parent=11 // pred_fallthru
          _
        // Predicated region
        $region25: #{bm_forward.1} parent=11 // pred_check
          %p194 = pneg %p123
        $region26: #{bm_forward.1} parent=11 // pred_check_branch
          %196 = sbr.rel (%p194) target = $region28
        $region27: #{bm_forward.1} parent=11 // pred_region
          _
        $region28: #{bm_forward.1} parent=11 // pred_fallthru
          _
        // Predicated region
        $region29: #{bm_forward.1} parent=11 // pred_check
          %p197 = pneg %p144
        $region30: #{bm_forward.1} parent=11 // pred_check_branch
          %199 = sbr.rel (%p197) target = $region32
        $region31: #{bm_forward.1} parent=11 // pred_region
          %s201 = ssub.s32 16, 16
          %202 = vsyncadd [#allocation3], %s201
          %s204 = sshll.u32 %s5, 4
          %s205 = int_to_ptr.vmem [resolvable:$true] %s204
          %207 = dma.vmem_to_smem %s205, 16, [#allocation2], [#allocation3]
        $region32: #{bm_forward.1} parent=11 // pred_fallthru
          _
      $region12: #{bm_forward.1} parent=5 // pred_fallthru
        _
      %p208 = scmp.lt.s32.totalorder %s13, 2
      // Predicated region
      $region33: #{bm_forward.1} parent=5 // pred_check
        %p209 = pneg %p208
      $region34: #{bm_forward.1} parent=5 // pred_check_branch
        %211 = sbr.rel (%p209) target = $region36
      $region35: #{bm_forward.1} parent=5 // pred_region
        // Predicated region
        $region37: #{bm_forward.1} parent=35 // pred_check
          %p212 = pneg %p33
        $region38: #{bm_forward.1} parent=35 // pred_check_branch
          %214 = sbr.rel (%p212) target = $region40
        $region39: #{bm_forward.1} parent=35 // pred_region
          %p215 = scmp.lt.s32.totalorder %s13, 1
          %s216 = scalar_select %p215, %s13, 1
          %s217 = smul.addr %s216, 3
          %s218 = smul.addr %s217, 8
          %s219 = scalar_lea.vmem %s0, %s218
        $region40: #{bm_forward.1} parent=35 // pred_fallthru
          _
      $region36: #{bm_forward.1} parent=5 // pred_fallthru
        _
      %p220 = scmp.le.s32.totalorder 1, %s13
      %p221 = scmp.lt.s32.totalorder %s13, 3
      %p222 = pnand %p220, %p221
      %p223 = pneg %p222
      // Predicated region
      $region41: #{bm_forward.1} parent=5 // pred_check
        _
      $region42: #{bm_forward.1} parent=5 // pred_check_branch
        %225 = sbr.rel (%p222) target = $region44
      $region43: #{bm_forward.1} parent=5 // pred_region
        %s226 = ssub.s32 %s13, 1
        // Predicated region
        $region45: #{bm_forward.1} parent=43 // pred_check
          %p227 = pneg %p144
        $region46: #{bm_forward.1} parent=43 // pred_check_branch
          %229 = sbr.rel (%p227) target = $region48
        $region47: #{bm_forward.1} parent=43 // pred_region
          %230 = dma.done [#allocation3], 16
        $region48: #{bm_forward.1} parent=43 // pred_fallthru
          _
        %231 = sfence
        %p232 = scmp.lt.s32.totalorder %s18, 1
        %s233 = scalar_select %p232, %s18, 1
        %s234 = smul.addr %s233, 3
        %s235 = smul.addr %s234, 8
        %s236 = scalar_lea.vmem %s0, %s235
        %p237 = pneg %p39
        %p238 = pneg %p36
        %p239 = pneg %p60
        %p240 = pneg %p57
        %p241 = pneg %p81
        %p242 = pneg %p78
        %p243 = pneg %p102
        %p244 = pneg %p99
        %p245 = pneg %p123
        %p246 = pneg %p120
        %p247 = pneg %p144
        %p248 = pneg %p141
        %p249 = pneg %p170
        %p250 = pneg %p167
        %p251 = scmp.lt.s32.totalorder %s18, 1
        %s252 = scalar_select %p251, %s18, 1
        %s253 = smul.addr %s252, 5
        %s254 = smul.addr %s253, 8
        %s255 = scalar_lea.vmem %s6, %s254
        %p256 = scmp.lt.s32.totalorder %s18, 1
        %s257 = scalar_select %p256, %s18, 1
        %s258 = smul.addr %s257, 3
        %s259 = smul.addr %s258, 8
        %s260 = scalar_lea.vmem %s0, %s259
        %p261 = scmp.lt.s32.totalorder %s18, 1
        %s262 = scalar_select %p261, %s18, 1
        %s263 = smul.addr %s262, 5
        %s264 = smul.addr %s263, 8
        %s265 = scalar_lea.vmem %s6, %s264
        %v266 = vld [vmem:[%s260] sm:$0xff]
        %v267 = vld [vmem:[%s260 + $0x8] sm:$0xff]
        %v268 = vld [vmem:[%s260 + $0x10] sm:$0xff]
        %v269 = vld [vmem:[%s2] sm:$0xff]
        %v270 = vld [vmem:[%s2 + $0x8] sm:$0xff]
        %v271 = vld [vmem:[%s2 + $0x10] sm:$0xff]
        %v272 = vld [vmem:[%s2 + $0x18] sm:$0xff]
        %vm273 = vcmask 261120
        %v275 = vsel %vm273, %v266, 0
        %v278 = vsel %vm273, %v267, 0
        %v281 = vsel %vm273, %v268, 0
        %283 = vmatprep.subr.mxu0 0.0
        %284 = vmatpush1.msra.mxu0 %v269
        %285 = vmatprep.subr.mxu0 0.0
        %286 = vmatpush1.msra.mxu0 %v270
        %287 = vmatprep.subr.mxu0 0.0
        %288 = vmatpush1.msra.mxu0 %v271
        %289 = vmatprep.subr.mxu0 0.0
        %290 = vmatpush1.msra.mxu0 %v272
        %291 = vmatprep.subr.mxu0 0.0
        %292 = vmatpush1.msra.mxu0 0.0
        %293 = vmatprep.subr.mxu0 0.0
        %294 = vmatpush1.msra.mxu0 0.0
        %295 = vmatprep.subr.mxu0 0.0
        %296 = vmatpush1.msra.mxu0 0.0
        %297 = vmatprep.subr.mxu0 0.0
        %298 = vmatpush1.msra.mxu0 0.0
        %299 = vmatprep.subr.mxu0 0.0
        %300 = vmatpush1.msra.mxu0 0.0
        %301 = vmatprep.subr.mxu0 0.0
        %302 = vmatpush1.msra.mxu0 0.0
        %303 = vmatprep.subr.mxu0 0.0
        %304 = vmatpush1.msra.mxu0 0.0
        %305 = vmatprep.subr.mxu0 0.0
        %306 = vmatpush1.msra.mxu0 0.0
        %307 = vmatprep.subr.mxu0 0.0
        %308 = vmatpush1.msra.mxu0 0.0
        %309 = vmatprep.subr.mxu0 0.0
        %310 = vmatpush1.msra.mxu0 0.0
        %311 = vmatprep.subr.mxu0 0.0
        %312 = vmatpush1.msra.mxu0 0.0
        %313 = vmatprep.subr.mxu0 0.0
        %314 = vmatpush1.msra.mxu0 0.0
        %315 = vmatprep.subr.mxu0 0.0
        %316 = vmatpush1.msra.mxu0 0.0
        %317 = vmatprep.subr.mxu0 0.0
        %318 = vmatpush1.msra.mxu0 0.0
        %319 = vmatprep.subr.mxu0 0.0
        %320 = vmatpush1.msra.mxu0 0.0
        %321 = vmatprep.subr.mxu0 0.0
        %322 = vmatpush1.msra.mxu0 0.0
        %323 = vmatprep.subr.mxu0 0.0
        %324 = vmatpush1.msra.mxu0 0.0
        %325 = vmatprep.subr.mxu0 0.0
        %326 = vmatpush1.msra.mxu0 0.0
        %327 = vmatprep.subr.mxu0 0.0
        %328 = vmatpush1.msra.mxu0 0.0
        %329 = vmatprep.subr.mxu0 0.0
        %330 = vmatpush1.msra.mxu0 0.0
        %331 = vmatprep.subr.mxu0 0.0
        %332 = vmatpush1.msra.mxu0 0.0
        %333 = vmatprep.subr.mxu0 0.0
        %334 = vmatpush1.msra.mxu0 0.0
        %335 = vmatprep.subr.mxu0 0.0
        %336 = vmatpush1.msra.mxu0 0.0
        %337 = vmatprep.subr.mxu0 0.0
        %338 = vmatpush1.msra.mxu0 0.0
        %339 = vmatprep.subr.mxu0 0.0
        %340 = vmatpush1.msra.mxu0 0.0
        %341 = vmatprep.subr.mxu0 0.0
        %342 = vmatpush1.msra.mxu0 0.0
        %343 = vmatprep.subr.mxu0 0.0
        %344 = vmatpush1.msra.mxu0 0.0
        %345 = vmatprep.subr.mxu0 0.0
        %346 = vmatpush1.msra.mxu0 0.0
        %347 = vmatprep.mubr.f32.mxu0 0.0
        %348 = vmatmul.mubr.f32.gmra.mrb[0].mxu0 %v275
        %v349 = vpop.f32.mrb[0].mxu0
        %v350 = vadd.f32 0.0, %v349
        %v351 = vpop.f32.mrb[0].mxu0
        %352 = vmatprep.mubr.f32.mxu0 0.0
        %353 = vmatmul.mubr.f32.gmra.mrb[0].mxu0 %v278
        %v354 = vpop.f32.mrb[0].mxu0
        %v355 = vadd.f32 0.0, %v354
        %v356 = vpop.f32.mrb[0].mxu0
        %357 = vmatprep.mubr.f32.mxu0 0.0
        %358 = vmatmul.mubr.f32.gmra.mrb[0].mxu0 %v281
        %v359 = vpop.f32.mrb[0].mxu0
        %v360 = vadd.f32 0.0, %v359
        %v361 = vpop.f32.mrb[0].mxu0
        %362 = vdwg.mxu0
        %s363 = scalar_lea.vmem %s2, 32
        %v364 = vld [vmem:[%s363] sm:$0xff]
        %v365 = vld [vmem:[%s363 + $0x8] sm:$0xff]
        %v366 = vld [vmem:[%s363 + $0x10] sm:$0xff]
        %v367 = vld [vmem:[%s363 + $0x18] sm:$0xff]
        %368 = vmatprep.subr.mxu0 0.0
        %369 = vmatpush1.msra.mxu0 %v364
        %370 = vmatprep.subr.mxu0 0.0
        %371 = vmatpush1.msra.mxu0 %v365
        %372 = vmatprep.subr.mxu0 0.0
        %373 = vmatpush1.msra.mxu0 %v366
        %374 = vmatprep.subr.mxu0 0.0
        %375 = vmatpush1.msra.mxu0 %v367
        %376 = vmatprep.subr.mxu0 0.0
        %377 = vmatpush1.msra.mxu0 0.0
        %378 = vmatprep.subr.mxu0 0.0
        %379 = vmatpush1.msra.mxu0 0.0
        %380 = vmatprep.subr.mxu0 0.0
        %381 = vmatpush1.msra.mxu0 0.0
        %382 = vmatprep.subr.mxu0 0.0
        %383 = vmatpush1.msra.mxu0 0.0
        %384 = vmatprep.subr.mxu0 0.0
        %385 = vmatpush1.msra.mxu0 0.0
        %386 = vmatprep.subr.mxu0 0.0
        %387 = vmatpush1.msra.mxu0 0.0
        %388 = vmatprep.subr.mxu0 0.0
        %389 = vmatpush1.msra.mxu0 0.0
        %390 = vmatprep.subr.mxu0 0.0
        %391 = vmatpush1.msra.mxu0 0.0
        %392 = vmatprep.subr.mxu0 0.0
        %393 = vmatpush1.msra.mxu0 0.0
        %394 = vmatprep.subr.mxu0 0.0
        %395 = vmatpush1.msra.mxu0 0.0
        %396 = vmatprep.subr.mxu0 0.0
        %397 = vmatpush1.msra.mxu0 0.0
        %398 = vmatprep.subr.mxu0 0.0
        %399 = vmatpush1.msra.mxu0 0.0
        %400 = vmatprep.subr.mxu0 0.0
        %401 = vmatpush1.msra.mxu0 0.0
        %402 = vmatprep.subr.mxu0 0.0
        %403 = vmatpush1.msra.mxu0 0.0
        %404 = vmatprep.subr.mxu0 0.0
        %405 = vmatpush1.msra.mxu0 0.0
        %406 = vmatprep.subr.mxu0 0.0
        %407 = vmatpush1.msra.mxu0 0.0
        %408 = vmatprep.subr.mxu0 0.0
        %409 = vmatpush1.msra.mxu0 0.0
        %410 = vmatprep.subr.mxu0 0.0
        %411 = vmatpush1.msra.mxu0 0.0
        %412 = vmatprep.subr.mxu0 0.0
        %413 = vmatpush1.msra.mxu0 0.0
        %414 = vmatprep.subr.mxu0 0.0
        %415 = vmatpush1.msra.mxu0 0.0
        %416 = vmatprep.subr.mxu0 0.0
        %417 = vmatpush1.msra.mxu0 0.0
        %418 = vmatprep.subr.mxu0 0.0
        %419 = vmatpush1.msra.mxu0 0.0
        %420 = vmatprep.subr.mxu0 0.0
        %421 = vmatpush1.msra.mxu0 0.0
        %422 = vmatprep.subr.mxu0 0.0
        %423 = vmatpush1.msra.mxu0 0.0
        %424 = vmatprep.subr.mxu0 0.0
        %425 = vmatpush1.msra.mxu0 0.0
        %426 = vmatprep.subr.mxu0 0.0
        %427 = vmatpush1.msra.mxu0 0.0
        %428 = vmatprep.subr.mxu0 0.0
        %429 = vmatpush1.msra.mxu0 0.0
        %430 = vmatprep.subr.mxu0 0.0
        %431 = vmatpush1.msra.mxu0 0.0
        %432 = vmatprep.mubr.f32.mxu0 0.0
        %433 = vmatmul.mubr.f32.gmra.mrb[0].mxu0 %v275
        %v434 = vpop.f32.mrb[0].mxu0
        %v435 = vadd.f32 0.0, %v434
        %v436 = vpop.f32.mrb[0].mxu0
        %437 = vmatprep.mubr.f32.mxu0 0.0
        %438 = vmatmul.mubr.f32.gmra.mrb[0].mxu0 %v278
        %v439 = vpop.f32.mrb[0].mxu0
        %v440 = vadd.f32 0.0, %v439
        %v441 = vpop.f32.mrb[0].mxu0
        %442 = vmatprep.mubr.f32.mxu0 0.0
        %443 = vmatmul.mubr.f32.gmra.mrb[0].mxu0 %v281
        %v444 = vpop.f32.mrb[0].mxu0
        %v445 = vadd.f32 0.0, %v444
        %v446 = vpop.f32.mrb[0].mxu0
        %447 = vdwg.mxu0
        %s448 = scalar_lea.vmem %s2, 64
        %v449 = vld [vmem:[%s448] sm:$0xff]
        %v450 = vld [vmem:[%s448 + $0x8] sm:$0xff]
        %v451 = vld [vmem:[%s448 + $0x10] sm:$0xff]
        %v452 = vld [vmem:[%s448 + $0x18] sm:$0xff]
        %453 = vmatprep.subr.mxu0 0.0
        %454 = vmatpush1.msra.mxu0 %v449
        %455 = vmatprep.subr.mxu0 0.0
        %456 = vmatpush1.msra.mxu0 %v450
        %457 = vmatprep.subr.mxu0 0.0
        %458 = vmatpush1.msra.mxu0 %v451
        %459 = vmatprep.subr.mxu0 0.0
        %460 = vmatpush1.msra.mxu0 %v452
        %461 = vmatprep.subr.mxu0 0.0
        %462 = vmatpush1.msra.mxu0 0.0
        %463 = vmatprep.subr.mxu0 0.0
        %464 = vmatpush1.msra.mxu0 0.0
        %465 = vmatprep.subr.mxu0 0.0
        %466 = vmatpush1.msra.mxu0 0.0
        %467 = vmatprep.subr.mxu0 0.0
        %468 = vmatpush1.msra.mxu0 0.0
        %469 = vmatprep.subr.mxu0 0.0
        %470 = vmatpush1.msra.mxu0 0.0
        %471 = vmatprep.subr.mxu0 0.0
        %472 = vmatpush1.msra.mxu0 0.0
        %473 = vmatprep.subr.mxu0 0.0
        %474 = vmatpush1.msra.mxu0 0.0
        %475 = vmatprep.subr.mxu0 0.0
        %476 = vmatpush1.msra.mxu0 0.0
        %477 = vmatprep.subr.mxu0 0.0
        %478 = vmatpush1.msra.mxu0 0.0
        %479 = vmatprep.subr.mxu0 0.0
        %480 = vmatpush1.msra.mxu0 0.0
        %481 = vmatprep.subr.mxu0 0.0
        %482 = vmatpush1.msra.mxu0 0.0
        %483 = vmatprep.subr.mxu0 0.0
        %484 = vmatpush1.msra.mxu0 0.0
        %485 = vmatprep.subr.mxu0 0.0
        %486 = vmatpush1.msra.mxu0 0.0
        %487 = vmatprep.subr.mxu0 0.0
        %488 = vmatpush1.msra.mxu0 0.0
        %489 = vmatprep.subr.mxu0 0.0
        %490 = vmatpush1.msra.mxu0 0.0
        %491 = vmatprep.subr.mxu0 0.0
        %492 = vmatpush1.msra.mxu0 0.0
        %493 = vmatprep.subr.mxu0 0.0
        %494 = vmatpush1.msra.mxu0 0.0
        %495 = vmatprep.subr.mxu0 0.0
        %496 = vmatpush1.msra.mxu0 0.0
        %497 = vmatprep.subr.mxu0 0.0
        %498 = vmatpush1.msra.mxu0 0.0
        %499 = vmatprep.subr.mxu0 0.0
        %500 = vmatpush1.msra.mxu0 0.0
        %501 = vmatprep.subr.mxu0 0.0
        %502 = vmatpush1.msra.mxu0 0.0
        %503 = vmatprep.subr.mxu0 0.0
        %504 = vmatpush1.msra.mxu0 0.0
        %505 = vmatprep.subr.mxu0 0.0
        %506 = vmatpush1.msra.mxu0 0.0
        %507 = vmatprep.subr.mxu0 0.0
        %508 = vmatpush1.msra.mxu0 0.0
        %509 = vmatprep.subr.mxu0 0.0
        %510 = vmatpush1.msra.mxu0 0.0
        %511 = vmatprep.subr.mxu0 0.0
        %512 = vmatpush1.msra.mxu0 0.0
        %513 = vmatprep.subr.mxu0 0.0
        %514 = vmatpush1.msra.mxu0 0.0
        %515 = vmatprep.subr.mxu0 0.0
        %516 = vmatpush1.msra.mxu0 0.0
        %517 = vmatprep.mubr.f32.mxu0 0.0
        %518 = vmatmul.mubr.f32.gmra.mrb[0].mxu0 %v275
        %v519 = vpop.f32.mrb[0].mxu0
        %v520 = vadd.f32 0.0, %v519
        %v521 = vpop.f32.mrb[0].mxu0
        %522 = vmatprep.mubr.f32.mxu0 0.0
        %523 = vmatmul.mubr.f32.gmra.mrb[0].mxu0 %v278
        %v524 = vpop.f32.mrb[0].mxu0
        %v525 = vadd.f32 0.0, %v524
        %v526 = vpop.f32.mrb[0].mxu0
        %527 = vmatprep.mubr.f32.mxu0 0.0
        %528 = vmatmul.mubr.f32.gmra.mrb[0].mxu0 %v281
        %v529 = vpop.f32.mrb[0].mxu0
        %v530 = vadd.f32 0.0, %v529
        %v531 = vpop.f32.mrb[0].mxu0
        %532 = vdwg.mxu0
        %v533 = vld [vmem:[%s1] sm:$0xff]
        %v534 = vld [vmem:[%s1 + $0x8] sm:$0xff]
        %v535 = vld [vmem:[%s1 + $0x10] sm:$0xff]
        %vm536 = vcmask 195584
        %v538 = vsel %vm536, %v533, 0
        %v541 = vsel %vm536, %v534, 0
        %v544 = vsel %vm536, %v535, 0
        %546 = vmatprep.subr.mxu0 0.0
        %547 = vmatpush1.msra.mxu0 %v350
        %548 = vmatprep.subr.mxu0 0.0
        %549 = vmatpush1.msra.mxu0 %v355
        %550 = vmatprep.subr.mxu0 0.0
        %551 = vmatpush1.msra.mxu0 %v360
        %552 = vmatprep.subr.mxu0 0.0
        %553 = vmatpush1.msra.mxu0 0.0
        %554 = vmatprep.subr.mxu0 0.0
        %555 = vmatpush1.msra.mxu0 0.0
        %556 = vmatprep.subr.mxu0 0.0
        %557 = vmatpush1.msra.mxu0 0.0
        %558 = vmatprep.subr.mxu0 0.0
        %559 = vmatpush1.msra.mxu0 0.0
        %560 = vmatprep.subr.mxu0 0.0
        %561 = vmatpush1.msra.mxu0 0.0
        %562 = vmatprep.subr.mxu0 0.0
        %563 = vmatpush1.msra.mxu0 0.0
        %564 = vmatprep.subr.mxu0 0.0
        %565 = vmatpush1.msra.mxu0 0.0
        %566 = vmatprep.subr.mxu0 0.0
        %567 = vmatpush1.msra.mxu0 0.0
        %568 = vmatprep.subr.mxu0 0.0
        %569 = vmatpush1.msra.mxu0 0.0
        %570 = vmatprep.subr.mxu0 0.0
        %571 = vmatpush1.msra.mxu0 0.0
        %572 = vmatprep.subr.mxu0 0.0
        %573 = vmatpush1.msra.mxu0 0.0
        %574 = vmatprep.subr.mxu0 0.0
        %575 = vmatpush1.msra.mxu0 0.0
        %576 = vmatprep.subr.mxu0 0.0
        %577 = vmatpush1.msra.mxu0 0.0
        %578 = vmatprep.subr.mxu0 0.0
        %579 = vmatpush1.msra.mxu0 0.0
        %580 = vmatprep.subr.mxu0 0.0
        %581 = vmatpush1.msra.mxu0 0.0
        %582 = vmatprep.subr.mxu0 0.0
        %583 = vmatpush1.msra.mxu0 0.0
        %584 = vmatprep.subr.mxu0 0.0
        %585 = vmatpush1.msra.mxu0 0.0
        %586 = vmatprep.subr.mxu0 0.0
        %587 = vmatpush1.msra.mxu0 0.0
        %588 = vmatprep.subr.mxu0 0.0
        %589 = vmatpush1.msra.mxu0 0.0
        %590 = vmatprep.subr.mxu0 0.0
        %591 = vmatpush1.msra.mxu0 0.0
        %592 = vmatprep.subr.mxu0 0.0
        %593 = vmatpush1.msra.mxu0 0.0
        %594 = vmatprep.subr.mxu0 0.0
        %595 = vmatpush1.msra.mxu0 0.0
        %596 = vmatprep.subr.mxu0 0.0
        %597 = vmatpush1.msra.mxu0 0.0
        %598 = vmatprep.subr.mxu0 0.0
        %599 = vmatpush1.msra.mxu0 0.0
        %600 = vmatprep.subr.mxu0 0.0
        %601 = vmatpush1.msra.mxu0 0.0
        %602 = vmatprep.subr.mxu0 0.0
        %603 = vmatpush1.msra.mxu0 0.0
        %604 = vmatprep.subr.mxu0 0.0
        %605 = vmatpush1.msra.mxu0 0.0
        %606 = vmatprep.subr.mxu0 0.0
        %607 = vmatpush1.msra.mxu0 0.0
        %608 = vmatprep.subr.mxu0 0.0
        %609 = vmatpush1.msra.mxu0 0.0
        %610 = vmatprep.mubr.f32.mxu0 0.0
        %611 = vmatmul.mubr.f32.gmra.mrb[0].mxu0 %v538
        %v612 = vpop.f32.mrb[0].mxu0
        %v613 = vadd.f32 %v435, %v612
        %v614 = vpop.f32.mrb[0].mxu0
        %615 = vmatprep.mubr.f32.mxu0 0.0
        %616 = vmatmul.mubr.f32.gmra.mrb[0].mxu0 %v541
        %v617 = vpop.f32.mrb[0].mxu0
        %v618 = vadd.f32 %v440, %v617
        %v619 = vpop.f32.mrb[0].mxu0
        %620 = vmatprep.mubr.f32.mxu0 0.0
        %621 = vmatmul.mubr.f32.gmra.mrb[0].mxu0 %v544
        %v622 = vpop.f32.mrb[0].mxu0
        %v623 = vadd.f32 %v445, %v622
        %v624 = vpop.f32.mrb[0].mxu0
        %625 = vdwg.mxu0
        %s626 = scalar_lea.vmem %s1, 24
        %v627 = vld [vmem:[%s626] sm:$0xff]
        %v628 = vld [vmem:[%s626 + $0x8] sm:$0xff]
        %v629 = vld [vmem:[%s626 + $0x10] sm:$0xff]
        %v631 = vsel %vm536, %v627, 0
        %v634 = vsel %vm536, %v628, 0
        %v637 = vsel %vm536, %v629, 0
        %639 = vmatprep.subr.mxu0 0.0
        %640 = vmatpush1.msra.mxu0 %v520
        %641 = vmatprep.subr.mxu0 0.0
        %642 = vmatpush1.msra.mxu0 %v525
        %643 = vmatprep.subr.mxu0 0.0
        %644 = vmatpush1.msra.mxu0 %v530
        %645 = vmatprep.subr.mxu0 0.0
        %646 = vmatpush1.msra.mxu0 0.0
        %647 = vmatprep.subr.mxu0 0.0
        %648 = vmatpush1.msra.mxu0 0.0
        %649 = vmatprep.subr.mxu0 0.0
        %650 = vmatpush1.msra.mxu0 0.0
        %651 = vmatprep.subr.mxu0 0.0
        %652 = vmatpush1.msra.mxu0 0.0
        %653 = vmatprep.subr.mxu0 0.0
        %654 = vmatpush1.msra.mxu0 0.0
        %655 = vmatprep.subr.mxu0 0.0
        %656 = vmatpush1.msra.mxu0 0.0
        %657 = vmatprep.subr.mxu0 0.0
        %658 = vmatpush1.msra.mxu0 0.0
        %659 = vmatprep.subr.mxu0 0.0
        %660 = vmatpush1.msra.mxu0 0.0
        %661 = vmatprep.subr.mxu0 0.0
        %662 = vmatpush1.msra.mxu0 0.0
        %663 = vmatprep.subr.mxu0 0.0
        %664 = vmatpush1.msra.mxu0 0.0
        %665 = vmatprep.subr.mxu0 0.0
        %666 = vmatpush1.msra.mxu0 0.0
        %667 = vmatprep.subr.mxu0 0.0
        %668 = vmatpush1.msra.mxu0 0.0
        %669 = vmatprep.subr.mxu0 0.0
        %670 = vmatpush1.msra.mxu0 0.0
        %671 = vmatprep.subr.mxu0 0.0
        %672 = vmatpush1.msra.mxu0 0.0
        %673 = vmatprep.subr.mxu0 0.0
        %674 = vmatpush1.msra.mxu0 0.0
        %675 = vmatprep.subr.mxu0 0.0
        %676 = vmatpush1.msra.mxu0 0.0
        %677 = vmatprep.subr.mxu0 0.0
        %678 = vmatpush1.msra.mxu0 0.0
        %679 = vmatprep.subr.mxu0 0.0
        %680 = vmatpush1.msra.mxu0 0.0
        %681 = vmatprep.subr.mxu0 0.0
        %682 = vmatpush1.msra.mxu0 0.0
        %683 = vmatprep.subr.mxu0 0.0
        %684 = vmatpush1.msra.mxu0 0.0
        %685 = vmatprep.subr.mxu0 0.0
        %686 = vmatpush1.msra.mxu0 0.0
        %687 = vmatprep.subr.mxu0 0.0
        %688 = vmatpush1.msra.mxu0 0.0
        %689 = vmatprep.subr.mxu0 0.0
        %690 = vmatpush1.msra.mxu0 0.0
        %691 = vmatprep.subr.mxu0 0.0
        %692 = vmatpush1.msra.mxu0 0.0
        %693 = vmatprep.subr.mxu0 0.0
        %694 = vmatpush1.msra.mxu0 0.0
        %695 = vmatprep.subr.mxu0 0.0
        %696 = vmatpush1.msra.mxu0 0.0
        %697 = vmatprep.subr.mxu0 0.0
        %698 = vmatpush1.msra.mxu0 0.0
        %699 = vmatprep.subr.mxu0 0.0
        %700 = vmatpush1.msra.mxu0 0.0
        %701 = vmatprep.subr.mxu0 0.0
        %702 = vmatpush1.msra.mxu0 0.0
        %703 = vmatprep.mubr.f32.mxu0 0.0
        %704 = vmatmul.mubr.f32.gmra.mrb[0].mxu0 %v631
        %v705 = vpop.f32.mrb[0].mxu0
        %v706 = vadd.f32 0.0, %v705
        %v707 = vpop.f32.mrb[0].mxu0
        %708 = vmatprep.mubr.f32.mxu0 0.0
        %709 = vmatmul.mubr.f32.gmra.mrb[0].mxu0 %v634
        %v710 = vpop.f32.mrb[0].mxu0
        %v711 = vadd.f32 0.0, %v710
        %v712 = vpop.f32.mrb[0].mxu0
        %713 = vmatprep.mubr.f32.mxu0 0.0
        %714 = vmatmul.mubr.f32.gmra.mrb[0].mxu0 %v637
        %v715 = vpop.f32.mrb[0].mxu0
        %v716 = vadd.f32 0.0, %v715
        %v717 = vpop.f32.mrb[0].mxu0
        %718 = vdwg.mxu0
        %v719 = vadd.f32 %v613, %v706
        %v720 = vadd.f32 %v618, %v711
        %v721 = vadd.f32 %v623, %v716
        %s722 = sld [smem:[#allocation2]]
        %v723 = vstv %s722
        %v724 = vadd.f32 %v719, %v723
        %v725 = vadd.f32 %v720, %v723
        %v726 = vadd.f32 %v721, %v723
        %v727 = vmax.f32 %v724, 0.0
        %v728 = vmax.f32 %v725, 0.0
        %v729 = vmax.f32 %v726, 0.0
        %s730 = scalar_lea.vmem %s2, 96
        %v731 = vld [vmem:[%s730] sm:$0xff]
        %v732 = vld [vmem:[%s730 + $0x8] sm:$0xff]
        %v733 = vld [vmem:[%s730 + $0x10] sm:$0xff]
        %v734 = vld [vmem:[%s730 + $0x18] sm:$0xff]
        %v736 = vsel %vm273, %v727, 0
        %v739 = vsel %vm273, %v728, 0
        %v742 = vsel %vm273, %v729, 0
        %744 = vmatprep.subr.mxu0 0.0
        %745 = vmatpush1.msra.mxu0 %v731
        %746 = vmatprep.subr.mxu0 0.0
        %747 = vmatpush1.msra.mxu0 %v732
        %748 = vmatprep.subr.mxu0 0.0
        %749 = vmatpush1.msra.mxu0 %v733
        %750 = vmatprep.subr.mxu0 0.0
        %751 = vmatpush1.msra.mxu0 %v734
        %752 = vmatprep.subr.mxu0 0.0
        %753 = vmatpush1.msra.mxu0 0.0
        %754 = vmatprep.subr.mxu0 0.0
        %755 = vmatpush1.msra.mxu0 0.0
        %756 = vmatprep.subr.mxu0 0.0
        %757 = vmatpush1.msra.mxu0 0.0
        %758 = vmatprep.subr.mxu0 0.0
        %759 = vmatpush1.msra.mxu0 0.0
        %760 = vmatprep.subr.mxu0 0.0
        %761 = vmatpush1.msra.mxu0 0.0
        %762 = vmatprep.subr.mxu0 0.0
        %763 = vmatpush1.msra.mxu0 0.0
        %764 = vmatprep.subr.mxu0 0.0
        %765 = vmatpush1.msra.mxu0 0.0
        %766 = vmatprep.subr.mxu0 0.0
        %767 = vmatpush1.msra.mxu0 0.0
        %768 = vmatprep.subr.mxu0 0.0
        %769 = vmatpush1.msra.mxu0 0.0
        %770 = vmatprep.subr.mxu0 0.0
        %771 = vmatpush1.msra.mxu0 0.0
        %772 = vmatprep.subr.mxu0 0.0
        %773 = vmatpush1.msra.mxu0 0.0
        %774 = vmatprep.subr.mxu0 0.0
        %775 = vmatpush1.msra.mxu0 0.0
        %776 = vmatprep.subr.mxu0 0.0
        %777 = vmatpush1.msra.mxu0 0.0
        %778 = vmatprep.subr.mxu0 0.0
        %779 = vmatpush1.msra.mxu0 0.0
        %780 = vmatprep.subr.mxu0 0.0
        %781 = vmatpush1.msra.mxu0 0.0
        %782 = vmatprep.subr.mxu0 0.0
        %783 = vmatpush1.msra.mxu0 0.0
        %784 = vmatprep.subr.mxu0 0.0
        %785 = vmatpush1.msra.mxu0 0.0
        %786 = vmatprep.subr.mxu0 0.0
        %787 = vmatpush1.msra.mxu0 0.0
        %788 = vmatprep.subr.mxu0 0.0
        %789 = vmatpush1.msra.mxu0 0.0
        %790 = vmatprep.subr.mxu0 0.0
        %791 = vmatpush1.msra.mxu0 0.0
        %792 = vmatprep.subr.mxu0 0.0
        %793 = vmatpush1.msra.mxu0 0.0
        %794 = vmatprep.subr.mxu0 0.0
        %795 = vmatpush1.msra.mxu0 0.0
        %796 = vmatprep.subr.mxu0 0.0
        %797 = vmatpush1.msra.mxu0 0.0
        %798 = vmatprep.subr.mxu0 0.0
        %799 = vmatpush1.msra.mxu0 0.0
        %800 = vmatprep.subr.mxu0 0.0
        %801 = vmatpush1.msra.mxu0 0.0
        %802 = vmatprep.subr.mxu0 0.0
        %803 = vmatpush1.msra.mxu0 0.0
        %804 = vmatprep.subr.mxu0 0.0
        %805 = vmatpush1.msra.mxu0 0.0
        %806 = vmatprep.subr.mxu0 0.0
        %807 = vmatpush1.msra.mxu0 0.0
        %808 = vmatprep.mubr.f32.mxu0 0.0
        %809 = vmatmul.mubr.f32.gmra.mrb[0].mxu0 %v736
        %v810 = vpop.f32.mrb[0].mxu0
        %v811 = vadd.f32 0.0, %v810
        %v812 = vpop.f32.mrb[0].mxu0
        %813 = vmatprep.mubr.f32.mxu0 0.0
        %814 = vmatmul.mubr.f32.gmra.mrb[0].mxu0 %v739
        %v815 = vpop.f32.mrb[0].mxu0
        %v816 = vadd.f32 0.0, %v815
        %v817 = vpop.f32.mrb[0].mxu0
        %818 = vmatprep.mubr.f32.mxu0 0.0
        %819 = vmatmul.mubr.f32.gmra.mrb[0].mxu0 %v742
        %v820 = vpop.f32.mrb[0].mxu0
        %v821 = vadd.f32 0.0, %v820
        %v822 = vpop.f32.mrb[0].mxu0
        %823 = vdwg.mxu0
        %s824 = scalar_lea.vmem %s2, 128
        %v825 = vld [vmem:[%s824] sm:$0xff]
        %v826 = vld [vmem:[%s824 + $0x8] sm:$0xff]
        %v827 = vld [vmem:[%s824 + $0x10] sm:$0xff]
        %v828 = vld [vmem:[%s824 + $0x18] sm:$0xff]
        %829 = vmatprep.subr.mxu0 0.0
        %830 = vmatpush1.msra.mxu0 %v825
        %831 = vmatprep.subr.mxu0 0.0
        %832 = vmatpush1.msra.mxu0 %v826
        %833 = vmatprep.subr.mxu0 0.0
        %834 = vmatpush1.msra.mxu0 %v827
        %835 = vmatprep.subr.mxu0 0.0
        %836 = vmatpush1.msra.mxu0 %v828
        %837 = vmatprep.subr.mxu0 0.0
        %838 = vmatpush1.msra.mxu0 0.0
        %839 = vmatprep.subr.mxu0 0.0
        %840 = vmatpush1.msra.mxu0 0.0
        %841 = vmatprep.subr.mxu0 0.0
        %842 = vmatpush1.msra.mxu0 0.0
        %843 = vmatprep.subr.mxu0 0.0
        %844 = vmatpush1.msra.mxu0 0.0
        %845 = vmatprep.subr.mxu0 0.0
        %846 = vmatpush1.msra.mxu0 0.0
        %847 = vmatprep.subr.mxu0 0.0
        %848 = vmatpush1.msra.mxu0 0.0
        %849 = vmatprep.subr.mxu0 0.0
        %850 = vmatpush1.msra.mxu0 0.0
        %851 = vmatprep.subr.mxu0 0.0
        %852 = vmatpush1.msra.mxu0 0.0
        %853 = vmatprep.subr.mxu0 0.0
        %854 = vmatpush1.msra.mxu0 0.0
        %855 = vmatprep.subr.mxu0 0.0
        %856 = vmatpush1.msra.mxu0 0.0
        %857 = vmatprep.subr.mxu0 0.0
        %858 = vmatpush1.msra.mxu0 0.0
        %859 = vmatprep.subr.mxu0 0.0
        %860 = vmatpush1.msra.mxu0 0.0
        %861 = vmatprep.subr.mxu0 0.0
        %862 = vmatpush1.msra.mxu0 0.0
        %863 = vmatprep.subr.mxu0 0.0
        %864 = vmatpush1.msra.mxu0 0.0
        %865 = vmatprep.subr.mxu0 0.0
        %866 = vmatpush1.msra.mxu0 0.0
        %867 = vmatprep.subr.mxu0 0.0
        %868 = vmatpush1.msra.mxu0 0.0
        %869 = vmatprep.subr.mxu0 0.0
        %870 = vmatpush1.msra.mxu0 0.0
        %871 = vmatprep.subr.mxu0 0.0
        %872 = vmatpush1.msra.mxu0 0.0
        %873 = vmatprep.subr.mxu0 0.0
        %874 = vmatpush1.msra.mxu0 0.0
        %875 = vmatprep.subr.mxu0 0.0
        %876 = vmatpush1.msra.mxu0 0.0
        %877 = vmatprep.subr.mxu0 0.0
        %878 = vmatpush1.msra.mxu0 0.0
        %879 = vmatprep.subr.mxu0 0.0
        %880 = vmatpush1.msra.mxu0 0.0
        %881 = vmatprep.subr.mxu0 0.0
        %882 = vmatpush1.msra.mxu0 0.0
        %883 = vmatprep.subr.mxu0 0.0
        %884 = vmatpush1.msra.mxu0 0.0
        %885 = vmatprep.subr.mxu0 0.0
        %886 = vmatpush1.msra.mxu0 0.0
        %887 = vmatprep.subr.mxu0 0.0
        %888 = vmatpush1.msra.mxu0 0.0
        %889 = vmatprep.subr.mxu0 0.0
        %890 = vmatpush1.msra.mxu0 0.0
        %891 = vmatprep.subr.mxu0 0.0
        %892 = vmatpush1.msra.mxu0 0.0
        %893 = vmatprep.mubr.f32.mxu0 0.0
        %894 = vmatmul.mubr.f32.gmra.mrb[0].mxu0 %v736
        %v895 = vpop.f32.mrb[0].mxu0
        %v896 = vadd.f32 0.0, %v895
        %v897 = vpop.f32.mrb[0].mxu0
        %898 = vmatprep.mubr.f32.mxu0 0.0
        %899 = vmatmul.mubr.f32.gmra.mrb[0].mxu0 %v739
        %v900 = vpop.f32.mrb[0].mxu0
        %v901 = vadd.f32 0.0, %v900
        %v902 = vpop.f32.mrb[0].mxu0
        %903 = vmatprep.mubr.f32.mxu0 0.0
        %904 = vmatmul.mubr.f32.gmra.mrb[0].mxu0 %v742
        %v905 = vpop.f32.mrb[0].mxu0
        %v906 = vadd.f32 0.0, %v905
        %v907 = vpop.f32.mrb[0].mxu0
        %908 = vdwg.mxu0
        %s909 = scalar_lea.vmem %s2, 160
        %v910 = vld [vmem:[%s909] sm:$0xff]
        %v911 = vld [vmem:[%s909 + $0x8] sm:$0xff]
        %v912 = vld [vmem:[%s909 + $0x10] sm:$0xff]
        %v913 = vld [vmem:[%s909 + $0x18] sm:$0xff]
        %914 = vmatprep.subr.mxu0 0.0
        %915 = vmatpush1.msra.mxu0 %v910
        %916 = vmatprep.subr.mxu0 0.0
        %917 = vmatpush1.msra.mxu0 %v911
        %918 = vmatprep.subr.mxu0 0.0
        %919 = vmatpush1.msra.mxu0 %v912
        %920 = vmatprep.subr.mxu0 0.0
        %921 = vmatpush1.msra.mxu0 %v913
        %922 = vmatprep.subr.mxu0 0.0
        %923 = vmatpush1.msra.mxu0 0.0
        %924 = vmatprep.subr.mxu0 0.0
        %925 = vmatpush1.msra.mxu0 0.0
        %926 = vmatprep.subr.mxu0 0.0
        %927 = vmatpush1.msra.mxu0 0.0
        %928 = vmatprep.subr.mxu0 0.0
        %929 = vmatpush1.msra.mxu0 0.0
        %930 = vmatprep.subr.mxu0 0.0
        %931 = vmatpush1.msra.mxu0 0.0
        %932 = vmatprep.subr.mxu0 0.0
        %933 = vmatpush1.msra.mxu0 0.0
        %934 = vmatprep.subr.mxu0 0.0
        %935 = vmatpush1.msra.mxu0 0.0
        %936 = vmatprep.subr.mxu0 0.0
        %937 = vmatpush1.msra.mxu0 0.0
        %938 = vmatprep.subr.mxu0 0.0
        %939 = vmatpush1.msra.mxu0 0.0
        %940 = vmatprep.subr.mxu0 0.0
        %941 = vmatpush1.msra.mxu0 0.0
        %942 = vmatprep.subr.mxu0 0.0
        %943 = vmatpush1.msra.mxu0 0.0
        %944 = vmatprep.subr.mxu0 0.0
        %945 = vmatpush1.msra.mxu0 0.0
        %946 = vmatprep.subr.mxu0 0.0
        %947 = vmatpush1.msra.mxu0 0.0
        %948 = vmatprep.subr.mxu0 0.0
        %949 = vmatpush1.msra.mxu0 0.0
        %950 = vmatprep.subr.mxu0 0.0
        %951 = vmatpush1.msra.mxu0 0.0
        %952 = vmatprep.subr.mxu0 0.0
        %953 = vmatpush1.msra.mxu0 0.0
        %954 = vmatprep.subr.mxu0 0.0
        %955 = vmatpush1.msra.mxu0 0.0
        %956 = vmatprep.subr.mxu0 0.0
        %957 = vmatpush1.msra.mxu0 0.0
        %958 = vmatprep.subr.mxu0 0.0
        %959 = vmatpush1.msra.mxu0 0.0
        %960 = vmatprep.subr.mxu0 0.0
        %961 = vmatpush1.msra.mxu0 0.0
        %962 = vmatprep.subr.mxu0 0.0
        %963 = vmatpush1.msra.mxu0 0.0
        %964 = vmatprep.subr.mxu0 0.0
        %965 = vmatpush1.msra.mxu0 0.0
        %966 = vmatprep.subr.mxu0 0.0
        %967 = vmatpush1.msra.mxu0 0.0
        %968 = vmatprep.subr.mxu0 0.0
        %969 = vmatpush1.msra.mxu0 0.0
        %970 = vmatprep.subr.mxu0 0.0
        %971 = vmatpush1.msra.mxu0 0.0
        %972 = vmatprep.subr.mxu0 0.0
        %973 = vmatpush1.msra.mxu0 0.0
        %974 = vmatprep.subr.mxu0 0.0
        %975 = vmatpush1.msra.mxu0 0.0
        %976 = vmatprep.subr.mxu0 0.0
        %977 = vmatpush1.msra.mxu0 0.0
        %978 = vmatprep.mubr.f32.mxu0 0.0
        %979 = vmatmul.mubr.f32.gmra.mrb[0].mxu0 %v736
        %v980 = vpop.f32.mrb[0].mxu0
        %v981 = vadd.f32 0.0, %v980
        %v982 = vpop.f32.mrb[0].mxu0
        %983 = vmatprep.mubr.f32.mxu0 0.0
        %984 = vmatmul.mubr.f32.gmra.mrb[0].mxu0 %v739
        %v985 = vpop.f32.mrb[0].mxu0
        %v986 = vadd.f32 0.0, %v985
        %v987 = vpop.f32.mrb[0].mxu0
        %988 = vmatprep.mubr.f32.mxu0 0.0
        %989 = vmatmul.mubr.f32.gmra.mrb[0].mxu0 %v742
        %v990 = vpop.f32.mrb[0].mxu0
        %v991 = vadd.f32 0.0, %v990
        %v992 = vpop.f32.mrb[0].mxu0
        %993 = vdwg.mxu0
        %994 = vmatprep.subr.mxu0 0.0
        %995 = vmatpush1.msra.mxu0 %v811
        %996 = vmatprep.subr.mxu0 0.0
        %997 = vmatpush1.msra.mxu0 %v816
        %998 = vmatprep.subr.mxu0 0.0
        %999 = vmatpush1.msra.mxu0 %v821
        %1000 = vmatprep.subr.mxu0 0.0
        %1001 = vmatpush1.msra.mxu0 0.0
        %1002 = vmatprep.subr.mxu0 0.0
        %1003 = vmatpush1.msra.mxu0 0.0
        %1004 = vmatprep.subr.mxu0 0.0
        %1005 = vmatpush1.msra.mxu0 0.0
        %1006 = vmatprep.subr.mxu0 0.0
        %1007 = vmatpush1.msra.mxu0 0.0
        %1008 = vmatprep.subr.mxu0 0.0
        %1009 = vmatpush1.msra.mxu0 0.0
        %1010 = vmatprep.subr.mxu0 0.0
        %1011 = vmatpush1.msra.mxu0 0.0
        %1012 = vmatprep.subr.mxu0 0.0
        %1013 = vmatpush1.msra.mxu0 0.0
        %1014 = vmatprep.subr.mxu0 0.0
        %1015 = vmatpush1.msra.mxu0 0.0
        %1016 = vmatprep.subr.mxu0 0.0
        %1017 = vmatpush1.msra.mxu0 0.0
        %1018 = vmatprep.subr.mxu0 0.0
        %1019 = vmatpush1.msra.mxu0 0.0
        %1020 = vmatprep.subr.mxu0 0.0
        %1021 = vmatpush1.msra.mxu0 0.0
        %1022 = vmatprep.subr.mxu0 0.0
        %1023 = vmatpush1.msra.mxu0 0.0
        %1024 = vmatprep.subr.mxu0 0.0
        %1025 = vmatpush1.msra.mxu0 0.0
        %1026 = vmatprep.subr.mxu0 0.0
        %1027 = vmatpush1.msra.mxu0 0.0
        %1028 = vmatprep.subr.mxu0 0.0
        %1029 = vmatpush1.msra.mxu0 0.0
        %1030 = vmatprep.subr.mxu0 0.0
        %1031 = vmatpush1.msra.mxu0 0.0
        %1032 = vmatprep.subr.mxu0 0.0
        %1033 = vmatpush1.msra.mxu0 0.0
        %1034 = vmatprep.subr.mxu0 0.0
        %1035 = vmatpush1.msra.mxu0 0.0
        %1036 = vmatprep.subr.mxu0 0.0
        %1037 = vmatpush1.msra.mxu0 0.0
        %1038 = vmatprep.subr.mxu0 0.0
        %1039 = vmatpush1.msra.mxu0 0.0
        %1040 = vmatprep.subr.mxu0 0.0
        %1041 = vmatpush1.msra.mxu0 0.0
        %1042 = vmatprep.subr.mxu0 0.0
        %1043 = vmatpush1.msra.mxu0 0.0
        %1044 = vmatprep.subr.mxu0 0.0
        %1045 = vmatpush1.msra.mxu0 0.0
        %1046 = vmatprep.subr.mxu0 0.0
        %1047 = vmatpush1.msra.mxu0 0.0
        %1048 = vmatprep.subr.mxu0 0.0
        %1049 = vmatpush1.msra.mxu0 0.0
        %1050 = vmatprep.subr.mxu0 0.0
        %1051 = vmatpush1.msra.mxu0 0.0
        %1052 = vmatprep.subr.mxu0 0.0
        %1053 = vmatpush1.msra.mxu0 0.0
        %1054 = vmatprep.subr.mxu0 0.0
        %1055 = vmatpush1.msra.mxu0 0.0
        %1056 = vmatprep.subr.mxu0 0.0
        %1057 = vmatpush1.msra.mxu0 0.0
        %1058 = vmatprep.mubr.f32.mxu0 0.0
        %1059 = vmatmul.mubr.f32.gmra.mrb[0].mxu0 %v538
        %v1060 = vpop.f32.mrb[0].mxu0
        %v1061 = vadd.f32 %v896, %v1060
        %v1062 = vpop.f32.mrb[0].mxu0
        %1063 = vmatprep.mubr.f32.mxu0 0.0
        %1064 = vmatmul.mubr.f32.gmra.mrb[0].mxu0 %v541
        %v1065 = vpop.f32.mrb[0].mxu0
        %v1066 = vadd.f32 %v901, %v1065
        %v1067 = vpop.f32.mrb[0].mxu0
        %1068 = vmatprep.mubr.f32.mxu0 0.0
        %1069 = vmatmul.mubr.f32.gmra.mrb[0].mxu0 %v544
        %v1070 = vpop.f32.mrb[0].mxu0
        %v1071 = vadd.f32 %v906, %v1070
        %v1072 = vpop.f32.mrb[0].mxu0
        %1073 = vdwg.mxu0
        %1074 = vmatprep.subr.mxu0 0.0
        %1075 = vmatpush1.msra.mxu0 %v981
        %1076 = vmatprep.subr.mxu0 0.0
        %1077 = vmatpush1.msra.mxu0 %v986
        %1078 = vmatprep.subr.mxu0 0.0
        %1079 = vmatpush1.msra.mxu0 %v991
        %1080 = vmatprep.subr.mxu0 0.0
        %1081 = vmatpush1.msra.mxu0 0.0
        %1082 = vmatprep.subr.mxu0 0.0
        %1083 = vmatpush1.msra.mxu0 0.0
        %1084 = vmatprep.subr.mxu0 0.0
        %1085 = vmatpush1.msra.mxu0 0.0
        %1086 = vmatprep.subr.mxu0 0.0
        %1087 = vmatpush1.msra.mxu0 0.0
        %1088 = vmatprep.subr.mxu0 0.0
        %1089 = vmatpush1.msra.mxu0 0.0
        %1090 = vmatprep.subr.mxu0 0.0
        %1091 = vmatpush1.msra.mxu0 0.0
        %1092 = vmatprep.subr.mxu0 0.0
        %1093 = vmatpush1.msra.mxu0 0.0
        %1094 = vmatprep.subr.mxu0 0.0
        %1095 = vmatpush1.msra.mxu0 0.0
        %1096 = vmatprep.subr.mxu0 0.0
        %1097 = vmatpush1.msra.mxu0 0.0
        %1098 = vmatprep.subr.mxu0 0.0
        %1099 = vmatpush1.msra.mxu0 0.0
        %1100 = vmatprep.subr.mxu0 0.0
        %1101 = vmatpush1.msra.mxu0 0.0
        %1102 = vmatprep.subr.mxu0 0.0
        %1103 = vmatpush1.msra.mxu0 0.0
        %1104 = vmatprep.subr.mxu0 0.0
        %1105 = vmatpush1.msra.mxu0 0.0
        %1106 = vmatprep.subr.mxu0 0.0
        %1107 = vmatpush1.msra.mxu0 0.0
        %1108 = vmatprep.subr.mxu0 0.0
        %1109 = vmatpush1.msra.mxu0 0.0
        %1110 = vmatprep.subr.mxu0 0.0
        %1111 = vmatpush1.msra.mxu0 0.0
        %1112 = vmatprep.subr.mxu0 0.0
        %1113 = vmatpush1.msra.mxu0 0.0
        %1114 = vmatprep.subr.mxu0 0.0
        %1115 = vmatpush1.msra.mxu0 0.0
        %1116 = vmatprep.subr.mxu0 0.0
        %1117 = vmatpush1.msra.mxu0 0.0
        %1118 = vmatprep.subr.mxu0 0.0
        %1119 = vmatpush1.msra.mxu0 0.0
        %1120 = vmatprep.subr.mxu0 0.0
        %1121 = vmatpush1.msra.mxu0 0.0
        %1122 = vmatprep.subr.mxu0 0.0
        %1123 = vmatpush1.msra.mxu0 0.0
        %1124 = vmatprep.subr.mxu0 0.0
        %1125 = vmatpush1.msra.mxu0 0.0
        %1126 = vmatprep.subr.mxu0 0.0
        %1127 = vmatpush1.msra.mxu0 0.0
        %1128 = vmatprep.subr.mxu0 0.0
        %1129 = vmatpush1.msra.mxu0 0.0
        %1130 = vmatprep.subr.mxu0 0.0
        %1131 = vmatpush1.msra.mxu0 0.0
        %1132 = vmatprep.subr.mxu0 0.0
        %1133 = vmatpush1.msra.mxu0 0.0
        %1134 = vmatprep.subr.mxu0 0.0
        %1135 = vmatpush1.msra.mxu0 0.0
        %1136 = vmatprep.subr.mxu0 0.0
        %1137 = vmatpush1.msra.mxu0 0.0
        %1138 = vmatprep.mubr.f32.mxu0 0.0
        %1139 = vmatmul.mubr.f32.gmra.mrb[0].mxu0 %v631
        %v1140 = vpop.f32.mrb[0].mxu0
        %v1141 = vadd.f32 0.0, %v1140
        %v1142 = vpop.f32.mrb[0].mxu0
        %1143 = vmatprep.mubr.f32.mxu0 0.0
        %1144 = vmatmul.mubr.f32.gmra.mrb[0].mxu0 %v634
        %v1145 = vpop.f32.mrb[0].mxu0
        %v1146 = vadd.f32 0.0, %v1145
        %v1147 = vpop.f32.mrb[0].mxu0
        %1148 = vmatprep.mubr.f32.mxu0 0.0
        %1149 = vmatmul.mubr.f32.gmra.mrb[0].mxu0 %v637
        %v1150 = vpop.f32.mrb[0].mxu0
        %v1151 = vadd.f32 0.0, %v1150
        %v1152 = vpop.f32.mrb[0].mxu0
        %1153 = vdwg.mxu0
        %v1154 = vadd.f32 %v1061, %v1141
        %v1155 = vadd.f32 %v1066, %v1146
        %v1156 = vadd.f32 %v1071, %v1151
        %s1157 = sld [smem:[#allocation2 + $0x1]]
        %v1158 = vstv %s1157
        %v1159 = vadd.f32 %v1154, %v1158
        %v1160 = vadd.f32 %v1155, %v1158
        %v1161 = vadd.f32 %v1156, %v1158
        %v1162 = vadd.f32 %v1159, %v266
        %v1163 = vadd.f32 %v1160, %v267
        %v1164 = vadd.f32 %v1161, %v268
        %v1165 = vld [vmem:[%s3] sm:$0xff]
        %v1166 = vld [vmem:[%s3 + $0x8] sm:$0xff]
        %v1167 = vld [vmem:[%s3 + $0x10] sm:$0xff]
        %v1168 = vld [vmem:[%s3 + $0x18] sm:$0xff]
        %v1169 = vld [vmem:[%s3 + $0x20] sm:$0xff]
        %v1170 = vld [vmem:[%s4] sm:$0xff]
        %v1171 = vld [vmem:[%s4 + $0x8] sm:$0xff]
        %v1172 = vld [vmem:[%s4 + $0x10] sm:$0xff]
        %v1173 = vld [vmem:[%s4 + $0x18] sm:$0xff]
        %v1175 = vsel %vm273, %v1162, 0
        %v1178 = vsel %vm273, %v1163, 0
        %v1181 = vsel %vm273, %v1164, 0
        %1183 = vmatprep.subr.mxu0 0.0
        %1184 = vmatpush1.msra.mxu0 %v1170
        %1185 = vmatprep.subr.mxu0 0.0
        %1186 = vmatpush1.msra.mxu0 %v1171
        %1187 = vmatprep.subr.mxu0 0.0
        %1188 = vmatpush1.msra.mxu0 %v1172
        %1189 = vmatprep.subr.mxu0 0.0
        %1190 = vmatpush1.msra.mxu0 %v1173
        %1191 = vmatprep.subr.mxu0 0.0
        %1192 = vmatpush1.msra.mxu0 0.0
        %1193 = vmatprep.subr.mxu0 0.0
        %1194 = vmatpush1.msra.mxu0 0.0
        %1195 = vmatprep.subr.mxu0 0.0
        %1196 = vmatpush1.msra.mxu0 0.0
        %1197 = vmatprep.subr.mxu0 0.0
        %1198 = vmatpush1.msra.mxu0 0.0
        %1199 = vmatprep.subr.mxu0 0.0
        %1200 = vmatpush1.msra.mxu0 0.0
        %1201 = vmatprep.subr.mxu0 0.0
        %1202 = vmatpush1.msra.mxu0 0.0
        %1203 = vmatprep.subr.mxu0 0.0
        %1204 = vmatpush1.msra.mxu0 0.0
        %1205 = vmatprep.subr.mxu0 0.0
        %1206 = vmatpush1.msra.mxu0 0.0
        %1207 = vmatprep.subr.mxu0 0.0
        %1208 = vmatpush1.msra.mxu0 0.0
        %1209 = vmatprep.subr.mxu0 0.0
        %1210 = vmatpush1.msra.mxu0 0.0
        %1211 = vmatprep.subr.mxu0 0.0
        %1212 = vmatpush1.msra.mxu0 0.0
        %1213 = vmatprep.subr.mxu0 0.0
        %1214 = vmatpush1.msra.mxu0 0.0
        %1215 = vmatprep.subr.mxu0 0.0
        %1216 = vmatpush1.msra.mxu0 0.0
        %1217 = vmatprep.subr.mxu0 0.0
        %1218 = vmatpush1.msra.mxu0 0.0
        %1219 = vmatprep.subr.mxu0 0.0
        %1220 = vmatpush1.msra.mxu0 0.0
        %1221 = vmatprep.subr.mxu0 0.0
        %1222 = vmatpush1.msra.mxu0 0.0
        %1223 = vmatprep.subr.mxu0 0.0
        %1224 = vmatpush1.msra.mxu0 0.0
        %1225 = vmatprep.subr.mxu0 0.0
        %1226 = vmatpush1.msra.mxu0 0.0
        %1227 = vmatprep.subr.mxu0 0.0
        %1228 = vmatpush1.msra.mxu0 0.0
        %1229 = vmatprep.subr.mxu0 0.0
        %1230 = vmatpush1.msra.mxu0 0.0
        %1231 = vmatprep.subr.mxu0 0.0
        %1232 = vmatpush1.msra.mxu0 0.0
        %1233 = vmatprep.subr.mxu0 0.0
        %1234 = vmatpush1.msra.mxu0 0.0
        %1235 = vmatprep.subr.mxu0 0.0
        %1236 = vmatpush1.msra.mxu0 0.0
        %1237 = vmatprep.subr.mxu0 0.0
        %1238 = vmatpush1.msra.mxu0 0.0
        %1239 = vmatprep.subr.mxu0 0.0
        %1240 = vmatpush1.msra.mxu0 0.0
        %1241 = vmatprep.subr.mxu0 0.0
        %1242 = vmatpush1.msra.mxu0 0.0
        %1243 = vmatprep.subr.mxu0 0.0
        %1244 = vmatpush1.msra.mxu0 0.0
        %1245 = vmatprep.subr.mxu0 0.0
        %1246 = vmatpush1.msra.mxu0 0.0
        %1247 = vmatprep.mubr.f32.mxu0 0.0
        %1248 = vmatmul.mubr.f32.gmra.mrb[0].mxu0 %v1175
        %v1249 = vpop.f32.mrb[0].mxu0
        %v1250 = vadd.f32 0.0, %v1249
        %v1251 = vpop.f32.mrb[0].mxu0
        %1252 = vmatprep.mubr.f32.mxu0 0.0
        %1253 = vmatmul.mubr.f32.gmra.mrb[0].mxu0 %v1178
        %v1254 = vpop.f32.mrb[0].mxu0
        %v1255 = vadd.f32 0.0, %v1254
        %v1256 = vpop.f32.mrb[0].mxu0
        %1257 = vmatprep.mubr.f32.mxu0 0.0
        %1258 = vmatmul.mubr.f32.gmra.mrb[0].mxu0 %v1181
        %v1259 = vpop.f32.mrb[0].mxu0
        %v1260 = vadd.f32 0.0, %v1259
        %v1261 = vpop.f32.mrb[0].mxu0
        %1262 = vdwg.mxu0
        %s1263 = scalar_lea.vmem %s3, 40
        %v1264 = vld [vmem:[%s1263] sm:$0xff]
        %v1265 = vld [vmem:[%s1263 + $0x8] sm:$0xff]
        %v1266 = vld [vmem:[%s1263 + $0x10] sm:$0xff]
        %v1267 = vld [vmem:[%s1263 + $0x18] sm:$0xff]
        %v1268 = vld [vmem:[%s1263 + $0x20] sm:$0xff]
        %s1269 = scalar_lea.vmem %s4, 32
        %v1270 = vld [vmem:[%s1269] sm:$0xff]
        %v1271 = vld [vmem:[%s1269 + $0x8] sm:$0xff]
        %v1272 = vld [vmem:[%s1269 + $0x10] sm:$0xff]
        %v1273 = vld [vmem:[%s1269 + $0x18] sm:$0xff]
        %1274 = vmatprep.subr.mxu0 0.0
        %1275 = vmatpush1.msra.mxu0 %v1270
        %1276 = vmatprep.subr.mxu0 0.0
        %1277 = vmatpush1.msra.mxu0 %v1271
        %1278 = vmatprep.subr.mxu0 0.0
        %1279 = vmatpush1.msra.mxu0 %v1272
        %1280 = vmatprep.subr.mxu0 0.0
        %1281 = vmatpush1.msra.mxu0 %v1273
        %1282 = vmatprep.subr.mxu0 0.0
        %1283 = vmatpush1.msra.mxu0 0.0
        %1284 = vmatprep.subr.mxu0 0.0
        %1285 = vmatpush1.msra.mxu0 0.0
        %1286 = vmatprep.subr.mxu0 0.0
        %1287 = vmatpush1.msra.mxu0 0.0
        %1288 = vmatprep.subr.mxu0 0.0
        %1289 = vmatpush1.msra.mxu0 0.0
        %1290 = vmatprep.subr.mxu0 0.0
        %1291 = vmatpush1.msra.mxu0 0.0
        %1292 = vmatprep.subr.mxu0 0.0
        %1293 = vmatpush1.msra.mxu0 0.0
        %1294 = vmatprep.subr.mxu0 0.0
        %1295 = vmatpush1.msra.mxu0 0.0
        %1296 = vmatprep.subr.mxu0 0.0
        %1297 = vmatpush1.msra.mxu0 0.0
        %1298 = vmatprep.subr.mxu0 0.0
        %1299 = vmatpush1.msra.mxu0 0.0
        %1300 = vmatprep.subr.mxu0 0.0
        %1301 = vmatpush1.msra.mxu0 0.0
        %1302 = vmatprep.subr.mxu0 0.0
        %1303 = vmatpush1.msra.mxu0 0.0
        %1304 = vmatprep.subr.mxu0 0.0
        %1305 = vmatpush1.msra.mxu0 0.0
        %1306 = vmatprep.subr.mxu0 0.0
        %1307 = vmatpush1.msra.mxu0 0.0
        %1308 = vmatprep.subr.mxu0 0.0
        %1309 = vmatpush1.msra.mxu0 0.0
        %1310 = vmatprep.subr.mxu0 0.0
        %1311 = vmatpush1.msra.mxu0 0.0
        %1312 = vmatprep.subr.mxu0 0.0
        %1313 = vmatpush1.msra.mxu0 0.0
        %1314 = vmatprep.subr.mxu0 0.0
        %1315 = vmatpush1.msra.mxu0 0.0
        %1316 = vmatprep.subr.mxu0 0.0
        %1317 = vmatpush1.msra.mxu0 0.0
        %1318 = vmatprep.subr.mxu0 0.0
        %1319 = vmatpush1.msra.mxu0 0.0
        %1320 = vmatprep.subr.mxu0 0.0
        %1321 = vmatpush1.msra.mxu0 0.0
        %1322 = vmatprep.subr.mxu0 0.0
        %1323 = vmatpush1.msra.mxu0 0.0
        %1324 = vmatprep.subr.mxu0 0.0
        %1325 = vmatpush1.msra.mxu0 0.0
        %1326 = vmatprep.subr.mxu0 0.0
        %1327 = vmatpush1.msra.mxu0 0.0
        %1328 = vmatprep.subr.mxu0 0.0
        %1329 = vmatpush1.msra.mxu0 0.0
        %1330 = vmatprep.subr.mxu0 0.0
        %1331 = vmatpush1.msra.mxu0 0.0
        %1332 = vmatprep.subr.mxu0 0.0
        %1333 = vmatpush1.msra.mxu0 0.0
        %1334 = vmatprep.subr.mxu0 0.0
        %1335 = vmatpush1.msra.mxu0 0.0
        %1336 = vmatprep.subr.mxu0 0.0
        %1337 = vmatpush1.msra.mxu0 0.0
        %1338 = vmatprep.mubr.f32.mxu0 0.0
        %1339 = vmatmul.mubr.f32.gmra.mrb[0].mxu0 %v1175
        %v1340 = vpop.f32.mrb[0].mxu0
        %v1341 = vadd.f32 0.0, %v1340
        %v1342 = vpop.f32.mrb[0].mxu0
        %1343 = vmatprep.mubr.f32.mxu0 0.0
        %1344 = vmatmul.mubr.f32.gmra.mrb[0].mxu0 %v1178
        %v1345 = vpop.f32.mrb[0].mxu0
        %v1346 = vadd.f32 0.0, %v1345
        %v1347 = vpop.f32.mrb[0].mxu0
        %1348 = vmatprep.mubr.f32.mxu0 0.0
        %1349 = vmatmul.mubr.f32.gmra.mrb[0].mxu0 %v1181
        %v1350 = vpop.f32.mrb[0].mxu0
        %v1351 = vadd.f32 0.0, %v1350
        %v1352 = vpop.f32.mrb[0].mxu0
        %1353 = vdwg.mxu0
        %v1355 = vsel %vm536, %v1264, 0
        %v1358 = vsel %vm536, %v1265, 0
        %v1361 = vsel %vm536, %v1266, 0
        %v1364 = vsel %vm536, %v1267, 0
        %v1367 = vsel %vm536, %v1268, 0
        %1369 = vmatprep.subr.mxu0 0.0
        %1370 = vmatpush1.msra.mxu0 %v1341
        %1371 = vmatprep.subr.mxu0 0.0
        %1372 = vmatpush1.msra.mxu0 %v1346
        %1373 = vmatprep.subr.mxu0 0.0
        %1374 = vmatpush1.msra.mxu0 %v1351
        %1375 = vmatprep.subr.mxu0 0.0
        %1376 = vmatpush1.msra.mxu0 0.0
        %1377 = vmatprep.subr.mxu0 0.0
        %1378 = vmatpush1.msra.mxu0 0.0
        %1379 = vmatprep.subr.mxu0 0.0
        %1380 = vmatpush1.msra.mxu0 0.0
        %1381 = vmatprep.subr.mxu0 0.0
        %1382 = vmatpush1.msra.mxu0 0.0
        %1383 = vmatprep.subr.mxu0 0.0
        %1384 = vmatpush1.msra.mxu0 0.0
        %1385 = vmatprep.subr.mxu0 0.0
        %1386 = vmatpush1.msra.mxu0 0.0
        %1387 = vmatprep.subr.mxu0 0.0
        %1388 = vmatpush1.msra.mxu0 0.0
        %1389 = vmatprep.subr.mxu0 0.0
        %1390 = vmatpush1.msra.mxu0 0.0
        %1391 = vmatprep.subr.mxu0 0.0
        %1392 = vmatpush1.msra.mxu0 0.0
        %1393 = vmatprep.subr.mxu0 0.0
        %1394 = vmatpush1.msra.mxu0 0.0
        %1395 = vmatprep.subr.mxu0 0.0
        %1396 = vmatpush1.msra.mxu0 0.0
        %1397 = vmatprep.subr.mxu0 0.0
        %1398 = vmatpush1.msra.mxu0 0.0
        %1399 = vmatprep.subr.mxu0 0.0
        %1400 = vmatpush1.msra.mxu0 0.0
        %1401 = vmatprep.subr.mxu0 0.0
        %1402 = vmatpush1.msra.mxu0 0.0
        %1403 = vmatprep.subr.mxu0 0.0
        %1404 = vmatpush1.msra.mxu0 0.0
        %1405 = vmatprep.subr.mxu0 0.0
        %1406 = vmatpush1.msra.mxu0 0.0
        %1407 = vmatprep.subr.mxu0 0.0
        %1408 = vmatpush1.msra.mxu0 0.0
        %1409 = vmatprep.subr.mxu0 0.0
        %1410 = vmatpush1.msra.mxu0 0.0
        %1411 = vmatprep.subr.mxu0 0.0
        %1412 = vmatpush1.msra.mxu0 0.0
        %1413 = vmatprep.subr.mxu0 0.0
        %1414 = vmatpush1.msra.mxu0 0.0
        %1415 = vmatprep.subr.mxu0 0.0
        %1416 = vmatpush1.msra.mxu0 0.0
        %1417 = vmatprep.subr.mxu0 0.0
        %1418 = vmatpush1.msra.mxu0 0.0
        %1419 = vmatprep.subr.mxu0 0.0
        %1420 = vmatpush1.msra.mxu0 0.0
        %1421 = vmatprep.subr.mxu0 0.0
        %1422 = vmatpush1.msra.mxu0 0.0
        %1423 = vmatprep.subr.mxu0 0.0
        %1424 = vmatpush1.msra.mxu0 0.0
        %1425 = vmatprep.subr.mxu0 0.0
        %1426 = vmatpush1.msra.mxu0 0.0
        %1427 = vmatprep.subr.mxu0 0.0
        %1428 = vmatpush1.msra.mxu0 0.0
        %1429 = vmatprep.subr.mxu0 0.0
        %1430 = vmatpush1.msra.mxu0 0.0
        %1431 = vmatprep.subr.mxu0 0.0
        %1432 = vmatpush1.msra.mxu0 0.0
        %1433 = vmatprep.mubr.f32.mxu0 0.0
        %1434 = vmatmul.mubr.f32.gmra.mrb[0].mxu0 %v1355
        %v1435 = vpop.f32.mrb[0].mxu0
        %v1436 = vadd.f32 0.0, %v1435
        %v1437 = vpop.f32.mrb[0].mxu0
        %1438 = vmatprep.mubr.f32.mxu0 0.0
        %1439 = vmatmul.mubr.f32.gmra.mrb[0].mxu0 %v1358
        %v1440 = vpop.f32.mrb[0].mxu0
        %v1441 = vadd.f32 0.0, %v1440
        %v1442 = vpop.f32.mrb[0].mxu0
        %1443 = vmatprep.mubr.f32.mxu0 0.0
        %1444 = vmatmul.mubr.f32.gmra.mrb[0].mxu0 %v1361
        %v1445 = vpop.f32.mrb[0].mxu0
        %v1446 = vadd.f32 0.0, %v1445
        %v1447 = vpop.f32.mrb[0].mxu0
        %1448 = vmatprep.mubr.f32.mxu0 0.0
        %1449 = vmatmul.mubr.f32.gmra.mrb[0].mxu0 %v1364
        %v1450 = vpop.f32.mrb[0].mxu0
        %v1451 = vadd.f32 0.0, %v1450
        %v1452 = vpop.f32.mrb[0].mxu0
        %1453 = vmatprep.mubr.f32.mxu0 0.0
        %1454 = vmatmul.mubr.f32.gmra.mrb[0].mxu0 %v1367
        %v1455 = vpop.f32.mrb[0].mxu0
        %v1456 = vadd.f32 0.0, %v1455
        %v1457 = vpop.f32.mrb[0].mxu0
        %1458 = vdwg.mxu0
        %v1460 = vsel %vm536, %v1165, 0
        %v1463 = vsel %vm536, %v1166, 0
        %v1466 = vsel %vm536, %v1167, 0
        %v1469 = vsel %vm536, %v1168, 0
        %v1472 = vsel %vm536, %v1169, 0
        %1474 = vmatprep.subr.mxu0 0.0
        %1475 = vmatpush1.msra.mxu0 %v1250
        %1476 = vmatprep.subr.mxu0 0.0
        %1477 = vmatpush1.msra.mxu0 %v1255
        %1478 = vmatprep.subr.mxu0 0.0
        %1479 = vmatpush1.msra.mxu0 %v1260
        %1480 = vmatprep.subr.mxu0 0.0
        %1481 = vmatpush1.msra.mxu0 0.0
        %1482 = vmatprep.subr.mxu0 0.0
        %1483 = vmatpush1.msra.mxu0 0.0
        %1484 = vmatprep.subr.mxu0 0.0
        %1485 = vmatpush1.msra.mxu0 0.0
        %1486 = vmatprep.subr.mxu0 0.0
        %1487 = vmatpush1.msra.mxu0 0.0
        %1488 = vmatprep.subr.mxu0 0.0
        %1489 = vmatpush1.msra.mxu0 0.0
        %1490 = vmatprep.subr.mxu0 0.0
        %1491 = vmatpush1.msra.mxu0 0.0
        %1492 = vmatprep.subr.mxu0 0.0
        %1493 = vmatpush1.msra.mxu0 0.0
        %1494 = vmatprep.subr.mxu0 0.0
        %1495 = vmatpush1.msra.mxu0 0.0
        %1496 = vmatprep.subr.mxu0 0.0
        %1497 = vmatpush1.msra.mxu0 0.0
        %1498 = vmatprep.subr.mxu0 0.0
        %1499 = vmatpush1.msra.mxu0 0.0
        %1500 = vmatprep.subr.mxu0 0.0
        %1501 = vmatpush1.msra.mxu0 0.0
        %1502 = vmatprep.subr.mxu0 0.0
        %1503 = vmatpush1.msra.mxu0 0.0
        %1504 = vmatprep.subr.mxu0 0.0
        %1505 = vmatpush1.msra.mxu0 0.0
        %1506 = vmatprep.subr.mxu0 0.0
        %1507 = vmatpush1.msra.mxu0 0.0
        %1508 = vmatprep.subr.mxu0 0.0
        %1509 = vmatpush1.msra.mxu0 0.0
        %1510 = vmatprep.subr.mxu0 0.0
        %1511 = vmatpush1.msra.mxu0 0.0
        %1512 = vmatprep.subr.mxu0 0.0
        %1513 = vmatpush1.msra.mxu0 0.0
        %1514 = vmatprep.subr.mxu0 0.0
        %1515 = vmatpush1.msra.mxu0 0.0
        %1516 = vmatprep.subr.mxu0 0.0
        %1517 = vmatpush1.msra.mxu0 0.0
        %1518 = vmatprep.subr.mxu0 0.0
        %1519 = vmatpush1.msra.mxu0 0.0
        %1520 = vmatprep.subr.mxu0 0.0
        %1521 = vmatpush1.msra.mxu0 0.0
        %1522 = vmatprep.subr.mxu0 0.0
        %1523 = vmatpush1.msra.mxu0 0.0
        %1524 = vmatprep.subr.mxu0 0.0
        %1525 = vmatpush1.msra.mxu0 0.0
        %1526 = vmatprep.subr.mxu0 0.0
        %1527 = vmatpush1.msra.mxu0 0.0
        %1528 = vmatprep.subr.mxu0 0.0
        %1529 = vmatpush1.msra.mxu0 0.0
        %1530 = vmatprep.subr.mxu0 0.0
        %1531 = vmatpush1.msra.mxu0 0.0
        %1532 = vmatprep.subr.mxu0 0.0
        %1533 = vmatpush1.msra.mxu0 0.0
        %1534 = vmatprep.subr.mxu0 0.0
        %1535 = vmatpush1.msra.mxu0 0.0
        %1536 = vmatprep.subr.mxu0 0.0
        %1537 = vmatpush1.msra.mxu0 0.0
        %1538 = vmatprep.mubr.f32.mxu0 0.0
        %1539 = vmatmul.mubr.f32.gmra.mrb[0].mxu0 %v1460
        %v1540 = vpop.f32.mrb[0].mxu0
        %v1541 = vadd.f32 %v1436, %v1540
        %v1542 = vpop.f32.mrb[0].mxu0
        %1543 = vmatprep.mubr.f32.mxu0 0.0
        %1544 = vmatmul.mubr.f32.gmra.mrb[0].mxu0 %v1463
        %v1545 = vpop.f32.mrb[0].mxu0
        %v1546 = vadd.f32 %v1441, %v1545
        %v1547 = vpop.f32.mrb[0].mxu0
        %1548 = vmatprep.mubr.f32.mxu0 0.0
        %1549 = vmatmul.mubr.f32.gmra.mrb[0].mxu0 %v1466
        %v1550 = vpop.f32.mrb[0].mxu0
        %v1551 = vadd.f32 %v1446, %v1550
        %v1552 = vpop.f32.mrb[0].mxu0
        %1553 = vmatprep.mubr.f32.mxu0 0.0
        %1554 = vmatmul.mubr.f32.gmra.mrb[0].mxu0 %v1469
        %v1555 = vpop.f32.mrb[0].mxu0
        %v1556 = vadd.f32 %v1451, %v1555
        %v1557 = vpop.f32.mrb[0].mxu0
        %1558 = vmatprep.mubr.f32.mxu0 0.0
        %1559 = vmatmul.mubr.f32.gmra.mrb[0].mxu0 %v1472
        %v1560 = vpop.f32.mrb[0].mxu0
        %v1561 = vadd.f32 %v1456, %v1560
        %v1562 = vpop.f32.mrb[0].mxu0
        %1563 = vdwg.mxu0
        %s1564 = scalar_lea.vmem %s3, 80
        %v1565 = vld [vmem:[%s1564] sm:$0xff]
        %v1566 = vld [vmem:[%s1564 + $0x8] sm:$0xff]
        %v1567 = vld [vmem:[%s1564 + $0x10] sm:$0xff]
        %v1568 = vld [vmem:[%s1564 + $0x18] sm:$0xff]
        %v1569 = vld [vmem:[%s1564 + $0x20] sm:$0xff]
        %s1570 = scalar_lea.vmem %s4, 64
        %v1571 = vld [vmem:[%s1570] sm:$0xff]
        %v1572 = vld [vmem:[%s1570 + $0x8] sm:$0xff]
        %v1573 = vld [vmem:[%s1570 + $0x10] sm:$0xff]
        %v1574 = vld [vmem:[%s1570 + $0x18] sm:$0xff]
        %1575 = vmatprep.subr.mxu0 0.0
        %1576 = vmatpush1.msra.mxu0 %v1571
        %1577 = vmatprep.subr.mxu0 0.0
        %1578 = vmatpush1.msra.mxu0 %v1572
        %1579 = vmatprep.subr.mxu0 0.0
        %1580 = vmatpush1.msra.mxu0 %v1573
        %1581 = vmatprep.subr.mxu0 0.0
        %1582 = vmatpush1.msra.mxu0 %v1574
        %1583 = vmatprep.subr.mxu0 0.0
        %1584 = vmatpush1.msra.mxu0 0.0
        %1585 = vmatprep.subr.mxu0 0.0
        %1586 = vmatpush1.msra.mxu0 0.0
        %1587 = vmatprep.subr.mxu0 0.0
        %1588 = vmatpush1.msra.mxu0 0.0
        %1589 = vmatprep.subr.mxu0 0.0
        %1590 = vmatpush1.msra.mxu0 0.0
        %1591 = vmatprep.subr.mxu0 0.0
        %1592 = vmatpush1.msra.mxu0 0.0
        %1593 = vmatprep.subr.mxu0 0.0
        %1594 = vmatpush1.msra.mxu0 0.0
        %1595 = vmatprep.subr.mxu0 0.0
        %1596 = vmatpush1.msra.mxu0 0.0
        %1597 = vmatprep.subr.mxu0 0.0
        %1598 = vmatpush1.msra.mxu0 0.0
        %1599 = vmatprep.subr.mxu0 0.0
        %1600 = vmatpush1.msra.mxu0 0.0
        %1601 = vmatprep.subr.mxu0 0.0
        %1602 = vmatpush1.msra.mxu0 0.0
        %1603 = vmatprep.subr.mxu0 0.0
        %1604 = vmatpush1.msra.mxu0 0.0
        %1605 = vmatprep.subr.mxu0 0.0
        %1606 = vmatpush1.msra.mxu0 0.0
        %1607 = vmatprep.subr.mxu0 0.0
        %1608 = vmatpush1.msra.mxu0 0.0
        %1609 = vmatprep.subr.mxu0 0.0
        %1610 = vmatpush1.msra.mxu0 0.0
        %1611 = vmatprep.subr.mxu0 0.0
        %1612 = vmatpush1.msra.mxu0 0.0
        %1613 = vmatprep.subr.mxu0 0.0
        %1614 = vmatpush1.msra.mxu0 0.0
        %1615 = vmatprep.subr.mxu0 0.0
        %1616 = vmatpush1.msra.mxu0 0.0
        %1617 = vmatprep.subr.mxu0 0.0
        %1618 = vmatpush1.msra.mxu0 0.0
        %1619 = vmatprep.subr.mxu0 0.0
        %1620 = vmatpush1.msra.mxu0 0.0
        %1621 = vmatprep.subr.mxu0 0.0
        %1622 = vmatpush1.msra.mxu0 0.0
        %1623 = vmatprep.subr.mxu0 0.0
        %1624 = vmatpush1.msra.mxu0 0.0
        %1625 = vmatprep.subr.mxu0 0.0
        %1626 = vmatpush1.msra.mxu0 0.0
        %1627 = vmatprep.subr.mxu0 0.0
        %1628 = vmatpush1.msra.mxu0 0.0
        %1629 = vmatprep.subr.mxu0 0.0
        %1630 = vmatpush1.msra.mxu0 0.0
        %1631 = vmatprep.subr.mxu0 0.0
        %1632 = vmatpush1.msra.mxu0 0.0
        %1633 = vmatprep.subr.mxu0 0.0
        %1634 = vmatpush1.msra.mxu0 0.0
        %1635 = vmatprep.subr.mxu0 0.0
        %1636 = vmatpush1.msra.mxu0 0.0
        %1637 = vmatprep.subr.mxu0 0.0
        %1638 = vmatpush1.msra.mxu0 0.0
        %1639 = vmatprep.mubr.f32.mxu0 0.0
        %1640 = vmatmul.mubr.f32.gmra.mrb[0].mxu0 %v1175
        %v1641 = vpop.f32.mrb[0].mxu0
        %v1642 = vadd.f32 0.0, %v1641
        %v1643 = vpop.f32.mrb[0].mxu0
        %1644 = vmatprep.mubr.f32.mxu0 0.0
        %1645 = vmatmul.mubr.f32.gmra.mrb[0].mxu0 %v1178
        %v1646 = vpop.f32.mrb[0].mxu0
        %v1647 = vadd.f32 0.0, %v1646
        %v1648 = vpop.f32.mrb[0].mxu0
        %1649 = vmatprep.mubr.f32.mxu0 0.0
        %1650 = vmatmul.mubr.f32.gmra.mrb[0].mxu0 %v1181
        %v1651 = vpop.f32.mrb[0].mxu0
        %v1652 = vadd.f32 0.0, %v1651
        %v1653 = vpop.f32.mrb[0].mxu0
        %1654 = vdwg.mxu0
        %v1656 = vsel %vm536, %v1565, 0
        %v1659 = vsel %vm536, %v1566, 0
        %v1662 = vsel %vm536, %v1567, 0
        %v1665 = vsel %vm536, %v1568, 0
        %v1668 = vsel %vm536, %v1569, 0
        %1670 = vmatprep.subr.mxu0 0.0
        %1671 = vmatpush1.msra.mxu0 %v1642
        %1672 = vmatprep.subr.mxu0 0.0
        %1673 = vmatpush1.msra.mxu0 %v1647
        %1674 = vmatprep.subr.mxu0 0.0
        %1675 = vmatpush1.msra.mxu0 %v1652
        %1676 = vmatprep.subr.mxu0 0.0
        %1677 = vmatpush1.msra.mxu0 0.0
        %1678 = vmatprep.subr.mxu0 0.0
        %1679 = vmatpush1.msra.mxu0 0.0
        %1680 = vmatprep.subr.mxu0 0.0
        %1681 = vmatpush1.msra.mxu0 0.0
        %1682 = vmatprep.subr.mxu0 0.0
        %1683 = vmatpush1.msra.mxu0 0.0
        %1684 = vmatprep.subr.mxu0 0.0
        %1685 = vmatpush1.msra.mxu0 0.0
        %1686 = vmatprep.subr.mxu0 0.0
        %1687 = vmatpush1.msra.mxu0 0.0
        %1688 = vmatprep.subr.mxu0 0.0
        %1689 = vmatpush1.msra.mxu0 0.0
        %1690 = vmatprep.subr.mxu0 0.0
        %1691 = vmatpush1.msra.mxu0 0.0
        %1692 = vmatprep.subr.mxu0 0.0
        %1693 = vmatpush1.msra.mxu0 0.0
        %1694 = vmatprep.subr.mxu0 0.0
        %1695 = vmatpush1.msra.mxu0 0.0
        %1696 = vmatprep.subr.mxu0 0.0
        %1697 = vmatpush1.msra.mxu0 0.0
        %1698 = vmatprep.subr.mxu0 0.0
        %1699 = vmatpush1.msra.mxu0 0.0
        %1700 = vmatprep.subr.mxu0 0.0
        %1701 = vmatpush1.msra.mxu0 0.0
        %1702 = vmatprep.subr.mxu0 0.0
        %1703 = vmatpush1.msra.mxu0 0.0
        %1704 = vmatprep.subr.mxu0 0.0
        %1705 = vmatpush1.msra.mxu0 0.0
        %1706 = vmatprep.subr.mxu0 0.0
        %1707 = vmatpush1.msra.mxu0 0.0
        %1708 = vmatprep.subr.mxu0 0.0
        %1709 = vmatpush1.msra.mxu0 0.0
        %1710 = vmatprep.subr.mxu0 0.0
        %1711 = vmatpush1.msra.mxu0 0.0
        %1712 = vmatprep.subr.mxu0 0.0
        %1713 = vmatpush1.msra.mxu0 0.0
        %1714 = vmatprep.subr.mxu0 0.0
        %1715 = vmatpush1.msra.mxu0 0.0
        %1716 = vmatprep.subr.mxu0 0.0
        %1717 = vmatpush1.msra.mxu0 0.0
        %1718 = vmatprep.subr.mxu0 0.0
        %1719 = vmatpush1.msra.mxu0 0.0
        %1720 = vmatprep.subr.mxu0 0.0
        %1721 = vmatpush1.msra.mxu0 0.0
        %1722 = vmatprep.subr.mxu0 0.0
        %1723 = vmatpush1.msra.mxu0 0.0
        %1724 = vmatprep.subr.mxu0 0.0
        %1725 = vmatpush1.msra.mxu0 0.0
        %1726 = vmatprep.subr.mxu0 0.0
        %1727 = vmatpush1.msra.mxu0 0.0
        %1728 = vmatprep.subr.mxu0 0.0
        %1729 = vmatpush1.msra.mxu0 0.0
        %1730 = vmatprep.subr.mxu0 0.0
        %1731 = vmatpush1.msra.mxu0 0.0
        %1732 = vmatprep.subr.mxu0 0.0
        %1733 = vmatpush1.msra.mxu0 0.0
        %1734 = vmatprep.mubr.f32.mxu0 0.0
        %1735 = vmatmul.mubr.f32.gmra.mrb[0].mxu0 %v1656
        %v1736 = vpop.f32.mrb[0].mxu0
        %v1737 = vadd.f32 0.0, %v1736
        %v1738 = vpop.f32.mrb[0].mxu0
        %1739 = vmatprep.mubr.f32.mxu0 0.0
        %1740 = vmatmul.mubr.f32.gmra.mrb[0].mxu0 %v1659
        %v1741 = vpop.f32.mrb[0].mxu0
        %v1742 = vadd.f32 0.0, %v1741
        %v1743 = vpop.f32.mrb[0].mxu0
        %1744 = vmatprep.mubr.f32.mxu0 0.0
        %1745 = vmatmul.mubr.f32.gmra.mrb[0].mxu0 %v1662
        %v1746 = vpop.f32.mrb[0].mxu0
        %v1747 = vadd.f32 0.0, %v1746
        %v1748 = vpop.f32.mrb[0].mxu0
        %1749 = vmatprep.mubr.f32.mxu0 0.0
        %1750 = vmatmul.mubr.f32.gmra.mrb[0].mxu0 %v1665
        %v1751 = vpop.f32.mrb[0].mxu0
        %v1752 = vadd.f32 0.0, %v1751
        %v1753 = vpop.f32.mrb[0].mxu0
        %1754 = vmatprep.mubr.f32.mxu0 0.0
        %1755 = vmatmul.mubr.f32.gmra.mrb[0].mxu0 %v1668
        %v1756 = vpop.f32.mrb[0].mxu0
        %v1757 = vadd.f32 0.0, %v1756
        %v1758 = vpop.f32.mrb[0].mxu0
        %1759 = vdwg.mxu0
        %v1760 = vadd.f32 %v1541, %v1737
        %v1761 = vadd.f32 %v1546, %v1742
        %v1762 = vadd.f32 %v1551, %v1747
        %v1763 = vadd.f32 %v1556, %v1752
        %v1764 = vadd.f32 %v1561, %v1757
        %s1765 = sld [smem:[#allocation2 + $0x2]]
        %v1766 = vstv %s1765
        %v1767 = vadd.f32 %v1760, %v1766
        %v1768 = vadd.f32 %v1761, %v1766
        %v1769 = vadd.f32 %v1762, %v1766
        %v1770 = vadd.f32 %v1763, %v1766
        %v1771 = vadd.f32 %v1764, %v1766
        %1772 = vst [vmem:[%s265] sm:$0xff] %v1767
        %1773 = vst [vmem:[%s265 + $0x8] sm:$0xff] %v1768
        %1774 = vst [vmem:[%s265 + $0x10] sm:$0xff] %v1769
        %1775 = vst [vmem:[%s265 + $0x18] sm:$0xff] %v1770
        %1776 = vst [vmem:[%s265 + $0x20] sm:$0xff] %v1771
        %p1777 = scmp.lt.s32.totalorder %s18, 1
        %s1778 = scalar_select %p1777, %s18, 1
        %s1779 = smul.addr %s1778, 5
        %s1780 = smul.addr %s1779, 8
        %s1781 = scalar_lea.vmem %s6, %s1780
        // Predicated region
        $region49: #{bm_forward.1} parent=43 // pred_check
          %p1782 = pneg %p167
        $region50: #{bm_forward.1} parent=43 // pred_check_branch
          %1784 = sbr.rel (%p1782) target = $region52
        $region51: #{bm_forward.1} parent=43 // pred_region
          _
        $region52: #{bm_forward.1} parent=43 // pred_fallthru
          _
      $region44: #{bm_forward.1} parent=5 // pred_fallthru
        _
      %p1785 = scmp.le.s32.totalorder 2, %s13
      // Predicated region
      $region53: #{bm_forward.1} parent=5 // pred_check
        %p1786 = pneg %p1785
      $region54: #{bm_forward.1} parent=5 // pred_check_branch
        %1788 = sbr.rel (%p1786) target = $region56
      $region55: #{bm_forward.1} parent=5 // pred_region
        %s1789 = ssub.s32 %s13, 2
        // Predicated region
        $region57: #{bm_forward.1} parent=55 // pred_check
          %p1790 = pneg %p173
        $region58: #{bm_forward.1} parent=55 // pred_check_branch
          %1792 = sbr.rel (%p1790) target = $region60
        $region59: #{bm_forward.1} parent=55 // pred_region
          %p1793 = scmp.lt.s32.totalorder %s19, 1
          %s1794 = scalar_select %p1793, %s19, 1
          %s1795 = smul.addr %s1794, 5
          %s1796 = smul.addr %s1795, 8
          %s1797 = scalar_lea.vmem %s6, %s1796
        $region60: #{bm_forward.1} parent=55 // pred_fallthru
          _
      $region56: #{bm_forward.1} parent=5 // pred_fallthru
        _
    $region6: #{bm_forward.1} parent=1 // loop_footer
      %s17 = sadd.s32 1, %s13
    $region7: #{bm_forward.1} parent=1 // loop_footer_branch
      %12 = sbr.rel target = $region3
    $region8: #{bm_forward.1} parent=1 // loop_exit
      _
    %1798 = vsyncpa [#allocation3], 1
    %s1799 = scalar_lea.sflag [#allocation3], 1
    %1800 = vsyncpa %s1799, 1

</llo_original>
